<compile_context>
chip_gen: v5e
topology: v5e:2x2
jax: 0.10.0
libtpu: 0.0.40
codegen_flags: <defaults>
</compile_context>

<pallas_src>
import functools
import math

import jax
import jax.numpy as jnp
from jax import lax
from jax.experimental import pallas as pl
from jax.experimental.pallas import tpu as pltpu

# ----------------------------- model config ---------------------------------
B = 2          # batch
S = 16         # sequence length
H = 32         # hidden size (context_hdim)
F = 64         # FFN intermediate
V = 50         # vocab size
VP = 64        # vocab padded (contraction dim for the one-hot embedding matmul)
N_LAYERS = 2
W = 4          # words per example selected by output_mask (static; see TODO below)
BS = B * S
BW = B * W
NEG = -1e9


# ------------------------------ kernel ---------------------------------------
def _layer_norm(x, g, b, eps=1e-12):
    mu = jnp.mean(x, axis=-1, keepdims=True)
    var = jnp.mean((x - mu) ** 2, axis=-1, keepdims=True)
    return (x - mu) * lax.rsqrt(var + eps) * g + b


def fused_encoder_kernel(ids_ref, tok_ref, pos_ref, embln_ref, bias_ref, sel_ref,
                         wq_ref, wk_ref, wv_ref, wo_ref, hv_ref, w1_ref, b1_ref,
                         w2_ref, o_ref):
    """One grid-less invocation: embedding -> N_LAYERS (unrolled) -> pooled out.

    hv_ref[l] rows: [bq, bk, bv, bo, ln1_g, ln1_b, b2, ln2_g, ln2_b]   (9, H)
    """
    # ---- embedding: token one-hot matmul (bf16) + positional + LayerNorm ----
    ids = ids_ref[...]                                           # (BS, 1) int32
    vocab_iota = lax.broadcasted_iota(jnp.int32, (BS, VP), 1)
    onehot = (vocab_iota == ids).astype(jnp.bfloat16)            # exact in bf16
    x0 = jnp.dot(onehot, tok_ref[...], preferred_element_type=jnp.float32)
    x0 = x0 + pos_ref[...]
    x = _layer_norm(x0, embln_ref[0:1, :], embln_ref[1:2, :])    # (BS, H) f32

    bias = bias_ref[...]                                         # (BS, BS) f32

    for l in range(N_LAYERS):        # static unrolled loop; activations stay in vregs
        xb = x.astype(jnp.bfloat16)
        # Three lane-aligned (H, H) matmuls; 1/sqrt(H) is folded into wq (init time).
        q = jnp.dot(xb, wq_ref[l], preferred_element_type=jnp.float32) + hv_ref[l, 0:1, :]
        k = jnp.dot(xb, wk_ref[l], preferred_element_type=jnp.float32) + hv_ref[l, 1:2, :]
        v = jnp.dot(xb, wv_ref[l], preferred_element_type=jnp.float32) + hv_ref[l, 2:3, :]

        # q @ k^T without materializing a transpose (contract on the shared H axis).
        scores = lax.dot_general(q.astype(jnp.bfloat16), k.astype(jnp.bfloat16),
                                 dimension_numbers=(((1,), (1,)), ((), ())),
                                 preferred_element_type=jnp.float32)
        scores = scores + bias           # key padding + cross-example blocking
        scores = scores - jnp.max(scores, axis=-1, keepdims=True)
        p = jnp.exp(scores)
        attn = p * pl.reciprocal(jnp.sum(p, axis=-1, keepdims=True), approx=True)

        ctx = jnp.dot(attn.astype(jnp.bfloat16), v.astype(jnp.bfloat16),
                      preferred_element_type=jnp.float32)
        attn_out = jnp.dot(ctx.astype(jnp.bfloat16), wo_ref[l],
                           preferred_element_type=jnp.float32) + hv_ref[l, 3:4, :]
        h = _layer_norm(x + attn_out, hv_ref[l, 4:5, :], hv_ref[l, 5:6, :])

        hb = h.astype(jnp.bfloat16)
        ff = jnp.dot(hb, w1_ref[l], preferred_element_type=jnp.float32) + b1_ref[l]
        # TODO(synk): PyTorch nn.GELU default is the exact erf form; tanh-approx kept
        # (erf lowering support in Mosaic is not guaranteed); diff is << tolerance.
        ff = jax.nn.gelu(ff, approximate=True)
        ff = jnp.dot(ff.astype(jnp.bfloat16), w2_ref[l],
                     preferred_element_type=jnp.float32) + hv_ref[l, 6:7, :]
        x = _layer_norm(h + ff, hv_ref[l, 7:8, :], hv_ref[l, 8:9, :])

    # ---- epilogue: precomputed, count-normalized word-pooling matrix ----------
    o_ref[...] = jnp.dot(sel_ref[...], x, preferred_element_type=jnp.float32)


# ------------------------------ wrapper ---------------------------------------
def _vmem_spec():
    return pl.BlockSpec(memory_space=pltpu.MemorySpace.VMEM)


def context_encoder_forward(params, input_ids, attn_mask, output_mask,
                            freeze_context=True):
    ids = input_ids.reshape(BS, 1).astype(jnp.int32)
    pos_bs = jnp.tile(params["pos"], (B, 1))                     # (BS, H)

    # additive attention bias: same-example AND real key -> 0, else -1e9
    batch_ids = jnp.repeat(jnp.arange(B, dtype=jnp.int32), S)    # (BS,)
    key_real = attn_mask.reshape(BS).astype(jnp.float32) > 0.5
    same_ex = batch_ids[:, None] == batch_ids[None, :]
    bias = jnp.where(same_ex & key_real[None, :], 0.0, NEG).astype(jnp.float32)

    # pooling matrix (word one-hot / per-word subword count), precomputed here
    # TODO(synk): PyTorch process_encoder_outputs is ragged per example; here the
    # word count W is static per example.
    om = output_mask.astype(jnp.int32)
    gmask = jnp.where(om >= 0, batch_ids.reshape(B, S) * W + om, -1).reshape(BS)
    sel = (jnp.arange(BW, dtype=jnp.int32)[:, None] == gmask[None, :]).astype(jnp.float32)
    counts = jnp.maximum(jnp.sum(sel, axis=-1, keepdims=True), 1.0)
    sel = sel / counts                                           # (BW, BS)

    n_in = 14
    pooled = pl.pallas_call(
        fused_encoder_kernel,
        out_shape=jax.ShapeDtypeStruct((BW, H), jnp.float32),
        in_specs=[_vmem_spec() for _ in range(n_in)],
        out_specs=_vmem_spec(),
    )(ids, params["tok"], pos_bs, params["embln"], bias, sel,
      params["wq"], params["wk"], params["wv"], params["wo"], params["hv"],
      params["w1"], params["b1"], params["w2"])

    out = pooled.reshape(B, W, H)   # row-major identical layout; free reshape
    if freeze_context:              # torch.no_grad() equivalent (forward-identical)
        out = lax.stop_gradient(out)
    return out


# --------------------------- parameter init (glue) ----------------------------
def init_params(key):
    def nxt():
        nonlocal key
        key, sub = jax.random.split(key)
        return sub

    tok = jnp.zeros((VP, H), jnp.float32).at[:V].set(
        0.02 * jax.random.normal(nxt(), (V, H), jnp.float32))
    pos = 0.02 * jax.random.normal(nxt(), (S, H), jnp.float32)
    embln = jnp.stack([jnp.ones(H, jnp.float32), jnp.zeros(H, jnp.float32)], axis=0)

    inv_sqrt_h = 1.0 / math.sqrt(H)
    wq, wk, wv, wo, w1, b1, w2, hv = [], [], [], [], [], [], [], []
    for _ in range(N_LAYERS):
        # 1/sqrt(H) attention scale folded into the Q projection (and its zero bias).
        wq.append(inv_sqrt_h * 0.02 * jax.random.normal(nxt(), (H, H), jnp.float32))
        wk.append(0.02 * jax.random.normal(nxt(), (H, H), jnp.float32))
        wv.append(0.02 * jax.random.normal(nxt(), (H, H), jnp.float32))
        wo.append(0.02 * jax.random.normal(nxt(), (H, H), jnp.float32))
        w1.append(0.02 * jax.random.normal(nxt(), (H, F), jnp.float32))
        b1.append(jnp.zeros((1, F), jnp.float32))
        w2.append(0.02 * jax.random.normal(nxt(), (F, H), jnp.float32))
        # [bq, bk, bv, bo, ln1 gamma, ln1 beta, b2, ln2 gamma, ln2 beta]
        hv.append(jnp.stack([
            jnp.zeros(H), jnp.zeros(H), jnp.zeros(H), jnp.zeros(H),
            jnp.ones(H), jnp.zeros(H),
            jnp.zeros(H), jnp.ones(H), jnp.zeros(H),
        ], axis=0).astype(jnp.float32))                          # (9, H)

    return {
        "tok": tok.astype(jnp.bfloat16), "pos": pos, "embln": embln,
        "wq": jnp.stack(wq).astype(jnp.bfloat16),
        "wk": jnp.stack(wk).astype(jnp.bfloat16),
        "wv": jnp.stack(wv).astype(jnp.bfloat16),
        "wo": jnp.stack(wo).astype(jnp.bfloat16),
        "hv": jnp.stack(hv),
        "w1": jnp.stack(w1).astype(jnp.bfloat16),
        "b1": jnp.stack(b1),
        "w2": jnp.stack(w2).astype(jnp.bfloat16),
    }


# ----------------------------- pure-JAX reference -----------------------------
def reference_forward(params, input_ids, attn_mask, output_mask):
    ids = input_ids.reshape(BS)
    tok = params["tok"].astype(jnp.float32)
    x = tok[ids] + jnp.tile(params["pos"], (B, 1))
    x = _layer_norm(x, params["embln"][0:1], params["embln"][1:2])

    batch_ids = jnp.repeat(jnp.arange(B, dtype=jnp.int32), S)
    key_real = attn_mask.reshape(BS) > 0.5
    bias = jnp.where((batch_ids[:, None] == batch_ids[None, :]) & key_real[None, :],
                     0.0, NEG)
    for l in range(N_LAYERS):
        hv = params["hv"][l]
        q = x @ params["wq"][l].astype(jnp.float32) + hv[0:1]   # scale folded in wq
        k = x @ params["wk"][l].astype(jnp.float32) + hv[1:2]
        v = x @ params["wv"][l].astype(jnp.float32) + hv[2:3]
        s = q @ k.T + bias
        attn = jax.nn.softmax(s, axis=-1)
        ao = attn @ v @ params["wo"][l].astype(jnp.float32) + hv[3:4]
        h = _layer_norm(x + ao, hv[4:5], hv[5:6])
        ff = jax.nn.gelu(h @ params["w1"][l].astype(jnp.float32) + params["b1"][l],
                         approximate=True)
        ff = ff @ params["w2"][l].astype(jnp.float32) + hv[6:7]
        x = _layer_norm(h + ff, hv[7:8], hv[8:9])

    om = output_mask.astype(jnp.int32)
    gmask = jnp.where(om >= 0, batch_ids.reshape(B, S) * W + om, -1).reshape(BS)
    sel = (jnp.arange(BW)[:, None] == gmask[None, :]).astype(jnp.float32)
    counts = jnp.maximum(sel.sum(-1, keepdims=True), 1.0)
    return (sel @ x / counts).reshape(B, W, H)


# ---------------------------------- main --------------------------------------
if __name__ == "__main__":
    key = jax.random.PRNGKey(0)
    key, pkey, ikey = jax.random.split(key, 3)
    params = init_params(pkey)

    input_ids = jax.random.randint(ikey, (B, S), 0, V, dtype=jnp.int32)
    # first 12 tokens real, last 4 padding
    attn_mask = (jnp.arange(S) < 12).astype(jnp.float32)[None, :].repeat(B, axis=0)
    # tokens 1..8 map to words 0..3 (2 subwords per word); everything else ignored
    word_pattern = jnp.array([0, 0, 1, 1, 2, 2, 3, 3], dtype=jnp.int32)
    output_mask = jnp.full((B, S), -1, dtype=jnp.int32)
    output_mask = output_mask.at[:, 1:9].set(word_pattern[None, :])

    fwd = jax.jit(functools.partial(context_encoder_forward, params,
                                    freeze_context=True))
    out = fwd(input_ids, attn_mask, output_mask)
    out = jax.block_until_ready(out)

    assert out.shape == (B, W, H), out.shape
    assert bool(jnp.all(jnp.isfinite(out)))

    ref = reference_forward(params, input_ids, attn_mask, output_mask)
    max_err = float(jnp.max(jnp.abs(out - ref)))
    assert max_err < 0.1, f"max abs err vs f32 reference: {max_err}"

    print("KERNEL_OK")
</pallas_src>

<mosaic_0001>
module attributes {stable_mosaic.version = 11 : i64} {
  func.func @fused_encoder_kernel(%arg0: memref<32x1xi32, #tpu.memory_space<vmem>>, %arg1: memref<64x32xbf16, #tpu.memory_space<vmem>>, %arg2: memref<32x32xf32, #tpu.memory_space<vmem>>, %arg3: memref<2x32xf32, #tpu.memory_space<vmem>>, %arg4: memref<32x32xf32, #tpu.memory_space<vmem>>, %arg5: memref<8x32xf32, #tpu.memory_space<vmem>>, %arg6: memref<2x32x32xbf16, #tpu.memory_space<vmem>>, %arg7: memref<2x32x32xbf16, #tpu.memory_space<vmem>>, %arg8: memref<2x32x32xbf16, #tpu.memory_space<vmem>>, %arg9: memref<2x32x32xbf16, #tpu.memory_space<vmem>>, %arg10: memref<2x9x32xf32, #tpu.memory_space<vmem>>, %arg11: memref<2x32x64xbf16, #tpu.memory_space<vmem>>, %arg12: memref<2x1x64xf32, #tpu.memory_space<vmem>>, %arg13: memref<2x64x32xbf16, #tpu.memory_space<vmem>>, %arg14: memref<8x32xf32, #tpu.memory_space<vmem>>) attributes {dimension_semantics = [], scalar_prefetch = 0 : i64, scratch_operands = 0 : i64, tpu.core_type = #tpu.core_type<tc>} {
    %c0 = arith.constant 0 : index
    %c0_0 = arith.constant 0 : index
    %0 = vector.load %arg0[%c0, %c0_0] : memref<32x1xi32, #tpu.memory_space<vmem>>, vector<32x1xi32>
    %1 = tpu.iota {dimensions = array<i32: 1>} : vector<32x64xi32>
    %2 = vector.broadcast %0 : vector<32x1xi32> to vector<32x64xi32>
    %3 = arith.cmpi eq, %1, %2 : vector<32x64xi32>
    %4 = arith.extui %3 : vector<32x64xi1> to vector<32x64xi32>
    %5 = arith.sitofp %4 : vector<32x64xi32> to vector<32x64xf32>
    %6 = arith.truncf %5 : vector<32x64xf32> to vector<32x64xbf16>
    %c0_1 = arith.constant 0 : index
    %c0_2 = arith.constant 0 : index
    %7 = vector.load %arg1[%c0_1, %c0_2] : memref<64x32xbf16, #tpu.memory_space<vmem>>, vector<64x32xbf16>
    %cst = arith.constant dense<0.000000e+00> : vector<32x32xf32>
    %8 = tpu.matmul %6, %7, %cst {dimension_numbers = #tpu.dot_dimension_numbers<[1], [0], [0], [1], [0, 0, 1, 1], [], []>} : vector<32x64xbf16>, vector<64x32xbf16>, vector<32x32xf32> -> vector<32x32xf32>
    %c0_3 = arith.constant 0 : index
    %c0_4 = arith.constant 0 : index
    %9 = vector.load %arg2[%c0_3, %c0_4] : memref<32x32xf32, #tpu.memory_space<vmem>>, vector<32x32xf32>
    %10 = arith.addf %8, %9 : vector<32x32xf32>
    %c0_5 = arith.constant 0 : index
    %c0_6 = arith.constant 0 : index
    %11 = vector.load %arg3[%c0_5, %c0_6] : memref<2x32xf32, #tpu.memory_space<vmem>>, vector<1x32xf32>
    %c1 = arith.constant 1 : index
    %c0_7 = arith.constant 0 : index
    %12 = vector.load %arg3[%c1, %c0_7] : memref<2x32xf32, #tpu.memory_space<vmem>>, vector<1x32xf32>
    %cst_8 = arith.constant dense<0.000000e+00> : vector<32xf32>
    %13 = vector.multi_reduction <add>, %10, %cst_8 [1] : vector<32x32xf32> to vector<32xf32>
    %14 = vector.shape_cast %13 : vector<32xf32> to vector<32x1xf32>
    %cst_9 = arith.constant 3.200000e+01 : f32
    %15 = vector.broadcast %cst_9 : f32 to vector<32x1xf32>
    %16 = arith.divf %14, %15 : vector<32x1xf32>
    %17 = vector.broadcast %16 : vector<32x1xf32> to vector<32x32xf32>
    %18 = arith.subf %10, %17 : vector<32x32xf32>
    %19 = arith.mulf %18, %18 : vector<32x32xf32>
    %cst_10 = arith.constant dense<0.000000e+00> : vector<32xf32>
    %20 = vector.multi_reduction <add>, %19, %cst_10 [1] : vector<32x32xf32> to vector<32xf32>
    %21 = vector.shape_cast %20 : vector<32xf32> to vector<32x1xf32>
    %cst_11 = arith.constant 3.200000e+01 : f32
    %22 = vector.broadcast %cst_11 : f32 to vector<32x1xf32>
    %23 = arith.divf %21, %22 : vector<32x1xf32>
    %24 = vector.broadcast %16 : vector<32x1xf32> to vector<32x32xf32>
    %25 = arith.subf %10, %24 : vector<32x32xf32>
    %cst_12 = arith.constant 9.99999996E-13 : f32
    %26 = vector.broadcast %cst_12 : f32 to vector<32x1xf32>
    %27 = arith.addf %23, %26 : vector<32x1xf32>
    %28 = math.rsqrt %27 : vector<32x1xf32>
    %29 = vector.broadcast %28 : vector<32x1xf32> to vector<32x32xf32>
    %30 = arith.mulf %25, %29 : vector<32x32xf32>
    %31 = vector.broadcast %11 : vector<1x32xf32> to vector<32x32xf32>
    %32 = arith.mulf %30, %31 : vector<32x32xf32>
    %33 = vector.broadcast %12 : vector<1x32xf32> to vector<32x32xf32>
    %34 = arith.addf %32, %33 : vector<32x32xf32>
    %c0_13 = arith.constant 0 : index
    %c0_14 = arith.constant 0 : index
    %35 = vector.load %arg4[%c0_13, %c0_14] : memref<32x32xf32, #tpu.memory_space<vmem>>, vector<32x32xf32>
    %36 = arith.truncf %34 : vector<32x32xf32> to vector<32x32xbf16>
    %c0_15 = arith.constant 0 : index
    %c0_16 = arith.constant 0 : index
    %c0_17 = arith.constant 0 : index
    %37 = vector.load %arg6[%c0_15, %c0_16, %c0_17] : memref<2x32x32xbf16, #tpu.memory_space<vmem>>, vector<1x32x32xbf16>
    %38 = vector.shape_cast %37 : vector<1x32x32xbf16> to vector<32x32xbf16>
    %cst_18 = arith.constant dense<0.000000e+00> : vector<32x32xf32>
    %39 = tpu.matmul %36, %38, %cst_18 {dimension_numbers = #tpu.dot_dimension_numbers<[1], [0], [0], [1], [0, 0, 1, 1], [], []>} : vector<32x32xbf16>, vector<32x32xbf16>, vector<32x32xf32> -> vector<32x32xf32>
    %c0_19 = arith.constant 0 : index
    %c0_20 = arith.constant 0 : index
    %c0_21 = arith.constant 0 : index
    %40 = vector.load %arg10[%c0_19, %c0_20, %c0_21] : memref<2x9x32xf32, #tpu.memory_space<vmem>>, vector<1x1x32xf32>
    %41 = vector.shape_cast %40 : vector<1x1x32xf32> to vector<1x32xf32>
    %42 = vector.broadcast %41 : vector<1x32xf32> to vector<32x32xf32>
    %43 = arith.addf %39, %42 : vector<32x32xf32>
    %c0_22 = arith.constant 0 : index
    %c0_23 = arith.constant 0 : index
    %c0_24 = arith.constant 0 : index
    %44 = vector.load %arg7[%c0_22, %c0_23, %c0_24] : memref<2x32x32xbf16, #tpu.memory_space<vmem>>, vector<1x32x32xbf16>
    %45 = vector.shape_cast %44 : vector<1x32x32xbf16> to vector<32x32xbf16>
    %cst_25 = arith.constant dense<0.000000e+00> : vector<32x32xf32>
    %46 = tpu.matmul %36, %45, %cst_25 {dimension_numbers = #tpu.dot_dimension_numbers<[1], [0], [0], [1], [0, 0, 1, 1], [], []>} : vector<32x32xbf16>, vector<32x32xbf16>, vector<32x32xf32> -> vector<32x32xf32>
    %c0_26 = arith.constant 0 : index
    %c1_27 = arith.constant 1 : index
    %c0_28 = arith.constant 0 : index
    %47 = vector.load %arg10[%c0_26, %c1_27, %c0_28] : memref<2x9x32xf32, #tpu.memory_space<vmem>>, vector<1x1x32xf32>
    %48 = vector.shape_cast %47 : vector<1x1x32xf32> to vector<1x32xf32>
    %49 = vector.broadcast %48 : vector<1x32xf32> to vector<32x32xf32>
    %50 = arith.addf %46, %49 : vector<32x32xf32>
    %c0_29 = arith.constant 0 : index
    %c0_30 = arith.constant 0 : index
    %c0_31 = arith.constant 0 : index
    %51 = vector.load %arg8[%c0_29, %c0_30, %c0_31] : memref<2x32x32xbf16, #tpu.memory_space<vmem>>, vector<1x32x32xbf16>
    %52 = vector.shape_cast %51 : vector<1x32x32xbf16> to vector<32x32xbf16>
    %cst_32 = arith.constant dense<0.000000e+00> : vector<32x32xf32>
    %53 = tpu.matmul %36, %52, %cst_32 {dimension_numbers = #tpu.dot_dimension_numbers<[1], [0], [0], [1], [0, 0, 1, 1], [], []>} : vector<32x32xbf16>, vector<32x32xbf16>, vector<32x32xf32> -> vector<32x32xf32>
    %c0_33 = arith.constant 0 : index
    %c2 = arith.constant 2 : index
    %c0_34 = arith.constant 0 : index
    %54 = vector.load %arg10[%c0_33, %c2, %c0_34] : memref<2x9x32xf32, #tpu.memory_space<vmem>>, vector<1x1x32xf32>
    %55 = vector.shape_cast %54 : vector<1x1x32xf32> to vector<1x32xf32>
    %56 = vector.broadcast %55 : vector<1x32xf32> to vector<32x32xf32>
    %57 = arith.addf %53, %56 : vector<32x32xf32>
    %58 = arith.truncf %43 : vector<32x32xf32> to vector<32x32xbf16>
    %59 = arith.truncf %50 : vector<32x32xf32> to vector<32x32xbf16>
    %cst_35 = arith.constant dense<0.000000e+00> : vector<32x32xf32>
    %60 = tpu.matmul %58, %59, %cst_35 {dimension_numbers = #tpu.dot_dimension_numbers<[1], [1], [0], [0], [0, 0, 1, 0], [], []>} : vector<32x32xbf16>, vector<32x32xbf16>, vector<32x32xf32> -> vector<32x32xf32>
    %61 = arith.addf %60, %35 : vector<32x32xf32>
    %cst_36 = arith.constant dense<0xFF800000> : vector<32xf32>
    %62 = vector.multi_reduction <maximumf>, %61, %cst_36 [1] : vector<32x32xf32> to vector<32xf32>
    %63 = vector.shape_cast %62 : vector<32xf32> to vector<32x1xf32>
    %64 = vector.broadcast %63 : vector<32x1xf32> to vector<32x32xf32>
    %65 = arith.subf %61, %64 : vector<32x32xf32>
    %66 = math.exp %65 : vector<32x32xf32>
    %cst_37 = arith.constant dense<0.000000e+00> : vector<32xf32>
    %67 = vector.multi_reduction <add>, %66, %cst_37 [1] : vector<32x32xf32> to vector<32xf32>
    %68 = vector.shape_cast %67 : vector<32xf32> to vector<32x1xf32>
    %69 = tpu.reciprocal %68 {approx = true} : vector<32x1xf32> -> vector<32x1xf32>
    %70 = vector.broadcast %69 : vector<32x1xf32> to vector<32x32xf32>
    %71 = arith.mulf %66, %70 : vector<32x32xf32>
    %72 = arith.truncf %71 : vector<32x32xf32> to vector<32x32xbf16>
    %73 = arith.truncf %57 : vector<32x32xf32> to vector<32x32xbf16>
    %cst_38 = arith.constant dense<0.000000e+00> : vector<32x32xf32>
    %74 = tpu.matmul %72, %73, %cst_38 {dimension_numbers = #tpu.dot_dimension_numbers<[1], [0], [0], [1], [0, 0, 1, 1], [], []>} : vector<32x32xbf16>, vector<32x32xbf16>, vector<32x32xf32> -> vector<32x32xf32>
    %75 = arith.truncf %74 : vector<32x32xf32> to vector<32x32xbf16>
    %c0_39 = arith.constant 0 : index
    %c0_40 = arith.constant 0 : index
    %c0_41 = arith.constant 0 : index
    %76 = vector.load %arg9[%c0_39, %c0_40, %c0_41] : memref<2x32x32xbf16, #tpu.memory_space<vmem>>, vector<1x32x32xbf16>
    %77 = vector.shape_cast %76 : vector<1x32x32xbf16> to vector<32x32xbf16>
    %cst_42 = arith.constant dense<0.000000e+00> : vector<32x32xf32>
    %78 = tpu.matmul %75, %77, %cst_42 {dimension_numbers = #tpu.dot_dimension_numbers<[1], [0], [0], [1], [0, 0, 1, 1], [], []>} : vector<32x32xbf16>, vector<32x32xbf16>, vector<32x32xf32> -> vector<32x32xf32>
    %c0_43 = arith.constant 0 : index
    %c3 = arith.constant 3 : index
    %c0_44 = arith.constant 0 : index
    %79 = vector.load %arg10[%c0_43, %c3, %c0_44] : memref<2x9x32xf32, #tpu.memory_space<vmem>>, vector<1x1x32xf32>
    %80 = vector.shape_cast %79 : vector<1x1x32xf32> to vector<1x32xf32>
    %81 = vector.broadcast %80 : vector<1x32xf32> to vector<32x32xf32>
    %82 = arith.addf %78, %81 : vector<32x32xf32>
    %83 = arith.addf %34, %82 : vector<32x32xf32>
    %c0_45 = arith.constant 0 : index
    %c4 = arith.constant 4 : index
    %c0_46 = arith.constant 0 : index
    %84 = vector.load %arg10[%c0_45, %c4, %c0_46] : memref<2x9x32xf32, #tpu.memory_space<vmem>>, vector<1x1x32xf32>
    %85 = vector.shape_cast %84 : vector<1x1x32xf32> to vector<1x32xf32>
    %c0_47 = arith.constant 0 : index
    %c5 = arith.constant 5 : index
    %c0_48 = arith.constant 0 : index
    %86 = vector.load %arg10[%c0_47, %c5, %c0_48] : memref<2x9x32xf32, #tpu.memory_space<vmem>>, vector<1x1x32xf32>
    %87 = vector.shape_cast %86 : vector<1x1x32xf32> to vector<1x32xf32>
    %cst_49 = arith.constant dense<0.000000e+00> : vector<32xf32>
    %88 = vector.multi_reduction <add>, %83, %cst_49 [1] : vector<32x32xf32> to vector<32xf32>
    %89 = vector.shape_cast %88 : vector<32xf32> to vector<32x1xf32>
    %cst_50 = arith.constant 3.200000e+01 : f32
    %90 = vector.broadcast %cst_50 : f32 to vector<32x1xf32>
    %91 = arith.divf %89, %90 : vector<32x1xf32>
    %92 = vector.broadcast %91 : vector<32x1xf32> to vector<32x32xf32>
    %93 = arith.subf %83, %92 : vector<32x32xf32>
    %94 = arith.mulf %93, %93 : vector<32x32xf32>
    %cst_51 = arith.constant dense<0.000000e+00> : vector<32xf32>
    %95 = vector.multi_reduction <add>, %94, %cst_51 [1] : vector<32x32xf32> to vector<32xf32>
    %96 = vector.shape_cast %95 : vector<32xf32> to vector<32x1xf32>
    %cst_52 = arith.constant 3.200000e+01 : f32
    %97 = vector.broadcast %cst_52 : f32 to vector<32x1xf32>
    %98 = arith.divf %96, %97 : vector<32x1xf32>
    %99 = vector.broadcast %91 : vector<32x1xf32> to vector<32x32xf32>
    %100 = arith.subf %83, %99 : vector<32x32xf32>
    %cst_53 = arith.constant 9.99999996E-13 : f32
    %101 = vector.broadcast %cst_53 : f32 to vector<32x1xf32>
    %102 = arith.addf %98, %101 : vector<32x1xf32>
    %103 = math.rsqrt %102 : vector<32x1xf32>
    %104 = vector.broadcast %103 : vector<32x1xf32> to vector<32x32xf32>
    %105 = arith.mulf %100, %104 : vector<32x32xf32>
    %106 = vector.broadcast %85 : vector<1x32xf32> to vector<32x32xf32>
    %107 = arith.mulf %105, %106 : vector<32x32xf32>
    %108 = vector.broadcast %87 : vector<1x32xf32> to vector<32x32xf32>
    %109 = arith.addf %107, %108 : vector<32x32xf32>
    %110 = arith.truncf %109 : vector<32x32xf32> to vector<32x32xbf16>
    %c0_54 = arith.constant 0 : index
    %c0_55 = arith.constant 0 : index
    %c0_56 = arith.constant 0 : index
    %111 = vector.load %arg11[%c0_54, %c0_55, %c0_56] : memref<2x32x64xbf16, #tpu.memory_space<vmem>>, vector<1x32x64xbf16>
    %112 = vector.shape_cast %111 : vector<1x32x64xbf16> to vector<32x64xbf16>
    %cst_57 = arith.constant dense<0.000000e+00> : vector<32x64xf32>
    %113 = tpu.matmul %110, %112, %cst_57 {dimension_numbers = #tpu.dot_dimension_numbers<[1], [0], [0], [1], [0, 0, 1, 1], [], []>} : vector<32x32xbf16>, vector<32x64xbf16>, vector<32x64xf32> -> vector<32x64xf32>
    %c0_58 = arith.constant 0 : index
    %c0_59 = arith.constant 0 : index
    %c0_60 = arith.constant 0 : index
    %114 = vector.load %arg12[%c0_58, %c0_59, %c0_60] : memref<2x1x64xf32, #tpu.memory_space<vmem>>, vector<1x1x64xf32>
    %115 = vector.shape_cast %114 : vector<1x1x64xf32> to vector<1x64xf32>
    %116 = vector.broadcast %115 : vector<1x64xf32> to vector<32x64xf32>
    %117 = arith.addf %113, %116 : vector<32x64xf32>
    %118 = arith.mulf %117, %117 : vector<32x64xf32>
    %119 = arith.mulf %117, %118 : vector<32x64xf32>
    %cst_61 = arith.constant 4.471500e-02 : f32
    %120 = vector.broadcast %cst_61 : f32 to vector<32x64xf32>
    %121 = arith.mulf %120, %119 : vector<32x64xf32>
    %122 = arith.addf %117, %121 : vector<32x64xf32>
    %cst_62 = arith.constant 0.797884583 : f32
    %123 = vector.broadcast %cst_62 : f32 to vector<32x64xf32>
    %124 = arith.mulf %123, %122 : vector<32x64xf32>
    %125 = math.tanh %124 : vector<32x64xf32>
    %cst_63 = arith.constant 1.000000e+00 : f32
    %126 = vector.broadcast %cst_63 : f32 to vector<32x64xf32>
    %127 = arith.addf %126, %125 : vector<32x64xf32>
    %cst_64 = arith.constant 5.000000e-01 : f32
    %128 = vector.broadcast %cst_64 : f32 to vector<32x64xf32>
    %129 = arith.mulf %128, %127 : vector<32x64xf32>
    %130 = arith.mulf %117, %129 : vector<32x64xf32>
    %131 = arith.truncf %130 : vector<32x64xf32> to vector<32x64xbf16>
    %c0_65 = arith.constant 0 : index
    %c0_66 = arith.constant 0 : index
    %c0_67 = arith.constant 0 : index
    %132 = vector.load %arg13[%c0_65, %c0_66, %c0_67] : memref<2x64x32xbf16, #tpu.memory_space<vmem>>, vector<1x64x32xbf16>
    %133 = vector.shape_cast %132 : vector<1x64x32xbf16> to vector<64x32xbf16>
    %cst_68 = arith.constant dense<0.000000e+00> : vector<32x32xf32>
    %134 = tpu.matmul %131, %133, %cst_68 {dimension_numbers = #tpu.dot_dimension_numbers<[1], [0], [0], [1], [0, 0, 1, 1], [], []>} : vector<32x64xbf16>, vector<64x32xbf16>, vector<32x32xf32> -> vector<32x32xf32>
    %c0_69 = arith.constant 0 : index
    %c6 = arith.constant 6 : index
    %c0_70 = arith.constant 0 : index
    %135 = vector.load %arg10[%c0_69, %c6, %c0_70] : memref<2x9x32xf32, #tpu.memory_space<vmem>>, vector<1x1x32xf32>
    %136 = vector.shape_cast %135 : vector<1x1x32xf32> to vector<1x32xf32>
    %137 = vector.broadcast %136 : vector<1x32xf32> to vector<32x32xf32>
    %138 = arith.addf %134, %137 : vector<32x32xf32>
    %139 = arith.addf %109, %138 : vector<32x32xf32>
    %c0_71 = arith.constant 0 : index
    %c7 = arith.constant 7 : index
    %c0_72 = arith.constant 0 : index
    %140 = vector.load %arg10[%c0_71, %c7, %c0_72] : memref<2x9x32xf32, #tpu.memory_space<vmem>>, vector<1x1x32xf32>
    %141 = vector.shape_cast %140 : vector<1x1x32xf32> to vector<1x32xf32>
    %c0_73 = arith.constant 0 : index
    %c8 = arith.constant 8 : index
    %c0_74 = arith.constant 0 : index
    %142 = vector.load %arg10[%c0_73, %c8, %c0_74] : memref<2x9x32xf32, #tpu.memory_space<vmem>>, vector<1x1x32xf32>
    %143 = vector.shape_cast %142 : vector<1x1x32xf32> to vector<1x32xf32>
    %cst_75 = arith.constant dense<0.000000e+00> : vector<32xf32>
    %144 = vector.multi_reduction <add>, %139, %cst_75 [1] : vector<32x32xf32> to vector<32xf32>
    %145 = vector.shape_cast %144 : vector<32xf32> to vector<32x1xf32>
    %cst_76 = arith.constant 3.200000e+01 : f32
    %146 = vector.broadcast %cst_76 : f32 to vector<32x1xf32>
    %147 = arith.divf %145, %146 : vector<32x1xf32>
    %148 = vector.broadcast %147 : vector<32x1xf32> to vector<32x32xf32>
    %149 = arith.subf %139, %148 : vector<32x32xf32>
    %150 = arith.mulf %149, %149 : vector<32x32xf32>
    %cst_77 = arith.constant dense<0.000000e+00> : vector<32xf32>
    %151 = vector.multi_reduction <add>, %150, %cst_77 [1] : vector<32x32xf32> to vector<32xf32>
    %152 = vector.shape_cast %151 : vector<32xf32> to vector<32x1xf32>
    %cst_78 = arith.constant 3.200000e+01 : f32
    %153 = vector.broadcast %cst_78 : f32 to vector<32x1xf32>
    %154 = arith.divf %152, %153 : vector<32x1xf32>
    %155 = vector.broadcast %147 : vector<32x1xf32> to vector<32x32xf32>
    %156 = arith.subf %139, %155 : vector<32x32xf32>
    %cst_79 = arith.constant 9.99999996E-13 : f32
    %157 = vector.broadcast %cst_79 : f32 to vector<32x1xf32>
    %158 = arith.addf %154, %157 : vector<32x1xf32>
    %159 = math.rsqrt %158 : vector<32x1xf32>
    %160 = vector.broadcast %159 : vector<32x1xf32> to vector<32x32xf32>
    %161 = arith.mulf %156, %160 : vector<32x32xf32>
    %162 = vector.broadcast %141 : vector<1x32xf32> to vector<32x32xf32>
    %163 = arith.mulf %161, %162 : vector<32x32xf32>
    %164 = vector.broadcast %143 : vector<1x32xf32> to vector<32x32xf32>
    %165 = arith.addf %163, %164 : vector<32x32xf32>
    %166 = arith.truncf %165 : vector<32x32xf32> to vector<32x32xbf16>
    %c1_80 = arith.constant 1 : index
    %c0_81 = arith.constant 0 : index
    %c0_82 = arith.constant 0 : index
    %167 = vector.load %arg6[%c1_80, %c0_81, %c0_82] : memref<2x32x32xbf16, #tpu.memory_space<vmem>>, vector<1x32x32xbf16>
    %168 = vector.shape_cast %167 : vector<1x32x32xbf16> to vector<32x32xbf16>
    %cst_83 = arith.constant dense<0.000000e+00> : vector<32x32xf32>
    %169 = tpu.matmul %166, %168, %cst_83 {dimension_numbers = #tpu.dot_dimension_numbers<[1], [0], [0], [1], [0, 0, 1, 1], [], []>} : vector<32x32xbf16>, vector<32x32xbf16>, vector<32x32xf32> -> vector<32x32xf32>
    %c1_84 = arith.constant 1 : index
    %c0_85 = arith.constant 0 : index
    %c0_86 = arith.constant 0 : index
    %170 = vector.load %arg10[%c1_84, %c0_85, %c0_86] : memref<2x9x32xf32, #tpu.memory_space<vmem>>, vector<1x1x32xf32>
    %171 = vector.shape_cast %170 : vector<1x1x32xf32> to vector<1x32xf32>
    %172 = vector.broadcast %171 : vector<1x32xf32> to vector<32x32xf32>
    %173 = arith.addf %169, %172 : vector<32x32xf32>
    %c1_87 = arith.constant 1 : index
    %c0_88 = arith.constant 0 : index
    %c0_89 = arith.constant 0 : index
    %174 = vector.load %arg7[%c1_87, %c0_88, %c0_89] : memref<2x32x32xbf16, #tpu.memory_space<vmem>>, vector<1x32x32xbf16>
    %175 = vector.shape_cast %174 : vector<1x32x32xbf16> to vector<32x32xbf16>
    %cst_90 = arith.constant dense<0.000000e+00> : vector<32x32xf32>
    %176 = tpu.matmul %166, %175, %cst_90 {dimension_numbers = #tpu.dot_dimension_numbers<[1], [0], [0], [1], [0, 0, 1, 1], [], []>} : vector<32x32xbf16>, vector<32x32xbf16>, vector<32x32xf32> -> vector<32x32xf32>
    %c1_91 = arith.constant 1 : index
    %c1_92 = arith.constant 1 : index
    %c0_93 = arith.constant 0 : index
    %177 = vector.load %arg10[%c1_91, %c1_92, %c0_93] : memref<2x9x32xf32, #tpu.memory_space<vmem>>, vector<1x1x32xf32>
    %178 = vector.shape_cast %177 : vector<1x1x32xf32> to vector<1x32xf32>
    %179 = vector.broadcast %178 : vector<1x32xf32> to vector<32x32xf32>
    %180 = arith.addf %176, %179 : vector<32x32xf32>
    %c1_94 = arith.constant 1 : index
    %c0_95 = arith.constant 0 : index
    %c0_96 = arith.constant 0 : index
    %181 = vector.load %arg8[%c1_94, %c0_95, %c0_96] : memref<2x32x32xbf16, #tpu.memory_space<vmem>>, vector<1x32x32xbf16>
    %182 = vector.shape_cast %181 : vector<1x32x32xbf16> to vector<32x32xbf16>
    %cst_97 = arith.constant dense<0.000000e+00> : vector<32x32xf32>
    %183 = tpu.matmul %166, %182, %cst_97 {dimension_numbers = #tpu.dot_dimension_numbers<[1], [0], [0], [1], [0, 0, 1, 1], [], []>} : vector<32x32xbf16>, vector<32x32xbf16>, vector<32x32xf32> -> vector<32x32xf32>
    %c1_98 = arith.constant 1 : index
    %c2_99 = arith.constant 2 : index
    %c0_100 = arith.constant 0 : index
    %184 = vector.load %arg10[%c1_98, %c2_99, %c0_100] : memref<2x9x32xf32, #tpu.memory_space<vmem>>, vector<1x1x32xf32>
    %185 = vector.shape_cast %184 : vector<1x1x32xf32> to vector<1x32xf32>
    %186 = vector.broadcast %185 : vector<1x32xf32> to vector<32x32xf32>
    %187 = arith.addf %183, %186 : vector<32x32xf32>
    %188 = arith.truncf %173 : vector<32x32xf32> to vector<32x32xbf16>
    %189 = arith.truncf %180 : vector<32x32xf32> to vector<32x32xbf16>
    %cst_101 = arith.constant dense<0.000000e+00> : vector<32x32xf32>
    %190 = tpu.matmul %188, %189, %cst_101 {dimension_numbers = #tpu.dot_dimension_numbers<[1], [1], [0], [0], [0, 0, 1, 0], [], []>} : vector<32x32xbf16>, vector<32x32xbf16>, vector<32x32xf32> -> vector<32x32xf32>
    %191 = arith.addf %190, %35 : vector<32x32xf32>
    %cst_102 = arith.constant dense<0xFF800000> : vector<32xf32>
    %192 = vector.multi_reduction <maximumf>, %191, %cst_102 [1] : vector<32x32xf32> to vector<32xf32>
    %193 = vector.shape_cast %192 : vector<32xf32> to vector<32x1xf32>
    %194 = vector.broadcast %193 : vector<32x1xf32> to vector<32x32xf32>
    %195 = arith.subf %191, %194 : vector<32x32xf32>
    %196 = math.exp %195 : vector<32x32xf32>
    %cst_103 = arith.constant dense<0.000000e+00> : vector<32xf32>
    %197 = vector.multi_reduction <add>, %196, %cst_103 [1] : vector<32x32xf32> to vector<32xf32>
    %198 = vector.shape_cast %197 : vector<32xf32> to vector<32x1xf32>
    %199 = tpu.reciprocal %198 {approx = true} : vector<32x1xf32> -> vector<32x1xf32>
    %200 = vector.broadcast %199 : vector<32x1xf32> to vector<32x32xf32>
    %201 = arith.mulf %196, %200 : vector<32x32xf32>
    %202 = arith.truncf %201 : vector<32x32xf32> to vector<32x32xbf16>
    %203 = arith.truncf %187 : vector<32x32xf32> to vector<32x32xbf16>
    %cst_104 = arith.constant dense<0.000000e+00> : vector<32x32xf32>
    %204 = tpu.matmul %202, %203, %cst_104 {dimension_numbers = #tpu.dot_dimension_numbers<[1], [0], [0], [1], [0, 0, 1, 1], [], []>} : vector<32x32xbf16>, vector<32x32xbf16>, vector<32x32xf32> -> vector<32x32xf32>
    %205 = arith.truncf %204 : vector<32x32xf32> to vector<32x32xbf16>
    %c1_105 = arith.constant 1 : index
    %c0_106 = arith.constant 0 : index
    %c0_107 = arith.constant 0 : index
    %206 = vector.load %arg9[%c1_105, %c0_106, %c0_107] : memref<2x32x32xbf16, #tpu.memory_space<vmem>>, vector<1x32x32xbf16>
    %207 = vector.shape_cast %206 : vector<1x32x32xbf16> to vector<32x32xbf16>
    %cst_108 = arith.constant dense<0.000000e+00> : vector<32x32xf32>
    %208 = tpu.matmul %205, %207, %cst_108 {dimension_numbers = #tpu.dot_dimension_numbers<[1], [0], [0], [1], [0, 0, 1, 1], [], []>} : vector<32x32xbf16>, vector<32x32xbf16>, vector<32x32xf32> -> vector<32x32xf32>
    %c1_109 = arith.constant 1 : index
    %c3_110 = arith.constant 3 : index
    %c0_111 = arith.constant 0 : index
    %209 = vector.load %arg10[%c1_109, %c3_110, %c0_111] : memref<2x9x32xf32, #tpu.memory_space<vmem>>, vector<1x1x32xf32>
    %210 = vector.shape_cast %209 : vector<1x1x32xf32> to vector<1x32xf32>
    %211 = vector.broadcast %210 : vector<1x32xf32> to vector<32x32xf32>
    %212 = arith.addf %208, %211 : vector<32x32xf32>
    %213 = arith.addf %165, %212 : vector<32x32xf32>
    %c1_112 = arith.constant 1 : index
    %c4_113 = arith.constant 4 : index
    %c0_114 = arith.constant 0 : index
    %214 = vector.load %arg10[%c1_112, %c4_113, %c0_114] : memref<2x9x32xf32, #tpu.memory_space<vmem>>, vector<1x1x32xf32>
    %215 = vector.shape_cast %214 : vector<1x1x32xf32> to vector<1x32xf32>
    %c1_115 = arith.constant 1 : index
    %c5_116 = arith.constant 5 : index
    %c0_117 = arith.constant 0 : index
    %216 = vector.load %arg10[%c1_115, %c5_116, %c0_117] : memref<2x9x32xf32, #tpu.memory_space<vmem>>, vector<1x1x32xf32>
    %217 = vector.shape_cast %216 : vector<1x1x32xf32> to vector<1x32xf32>
    %cst_118 = arith.constant dense<0.000000e+00> : vector<32xf32>
    %218 = vector.multi_reduction <add>, %213, %cst_118 [1] : vector<32x32xf32> to vector<32xf32>
    %219 = vector.shape_cast %218 : vector<32xf32> to vector<32x1xf32>
    %cst_119 = arith.constant 3.200000e+01 : f32
    %220 = vector.broadcast %cst_119 : f32 to vector<32x1xf32>
    %221 = arith.divf %219, %220 : vector<32x1xf32>
    %222 = vector.broadcast %221 : vector<32x1xf32> to vector<32x32xf32>
    %223 = arith.subf %213, %222 : vector<32x32xf32>
    %224 = arith.mulf %223, %223 : vector<32x32xf32>
    %cst_120 = arith.constant dense<0.000000e+00> : vector<32xf32>
    %225 = vector.multi_reduction <add>, %224, %cst_120 [1] : vector<32x32xf32> to vector<32xf32>
    %226 = vector.shape_cast %225 : vector<32xf32> to vector<32x1xf32>
    %cst_121 = arith.constant 3.200000e+01 : f32
    %227 = vector.broadcast %cst_121 : f32 to vector<32x1xf32>
    %228 = arith.divf %226, %227 : vector<32x1xf32>
    %229 = vector.broadcast %221 : vector<32x1xf32> to vector<32x32xf32>
    %230 = arith.subf %213, %229 : vector<32x32xf32>
    %cst_122 = arith.constant 9.99999996E-13 : f32
    %231 = vector.broadcast %cst_122 : f32 to vector<32x1xf32>
    %232 = arith.addf %228, %231 : vector<32x1xf32>
    %233 = math.rsqrt %232 : vector<32x1xf32>
    %234 = vector.broadcast %233 : vector<32x1xf32> to vector<32x32xf32>
    %235 = arith.mulf %230, %234 : vector<32x32xf32>
    %236 = vector.broadcast %215 : vector<1x32xf32> to vector<32x32xf32>
    %237 = arith.mulf %235, %236 : vector<32x32xf32>
    %238 = vector.broadcast %217 : vector<1x32xf32> to vector<32x32xf32>
    %239 = arith.addf %237, %238 : vector<32x32xf32>
    %240 = arith.truncf %239 : vector<32x32xf32> to vector<32x32xbf16>
    %c1_123 = arith.constant 1 : index
    %c0_124 = arith.constant 0 : index
    %c0_125 = arith.constant 0 : index
    %241 = vector.load %arg11[%c1_123, %c0_124, %c0_125] : memref<2x32x64xbf16, #tpu.memory_space<vmem>>, vector<1x32x64xbf16>
    %242 = vector.shape_cast %241 : vector<1x32x64xbf16> to vector<32x64xbf16>
    %cst_126 = arith.constant dense<0.000000e+00> : vector<32x64xf32>
    %243 = tpu.matmul %240, %242, %cst_126 {dimension_numbers = #tpu.dot_dimension_numbers<[1], [0], [0], [1], [0, 0, 1, 1], [], []>} : vector<32x32xbf16>, vector<32x64xbf16>, vector<32x64xf32> -> vector<32x64xf32>
    %c1_127 = arith.constant 1 : index
    %c0_128 = arith.constant 0 : index
    %c0_129 = arith.constant 0 : index
    %244 = vector.load %arg12[%c1_127, %c0_128, %c0_129] : memref<2x1x64xf32, #tpu.memory_space<vmem>>, vector<1x1x64xf32>
    %245 = vector.shape_cast %244 : vector<1x1x64xf32> to vector<1x64xf32>
    %246 = vector.broadcast %245 : vector<1x64xf32> to vector<32x64xf32>
    %247 = arith.addf %243, %246 : vector<32x64xf32>
    %248 = arith.mulf %247, %247 : vector<32x64xf32>
    %249 = arith.mulf %247, %248 : vector<32x64xf32>
    %cst_130 = arith.constant 4.471500e-02 : f32
    %250 = vector.broadcast %cst_130 : f32 to vector<32x64xf32>
    %251 = arith.mulf %250, %249 : vector<32x64xf32>
    %252 = arith.addf %247, %251 : vector<32x64xf32>
    %cst_131 = arith.constant 0.797884583 : f32
    %253 = vector.broadcast %cst_131 : f32 to vector<32x64xf32>
    %254 = arith.mulf %253, %252 : vector<32x64xf32>
    %255 = math.tanh %254 : vector<32x64xf32>
    %cst_132 = arith.constant 1.000000e+00 : f32
    %256 = vector.broadcast %cst_132 : f32 to vector<32x64xf32>
    %257 = arith.addf %256, %255 : vector<32x64xf32>
    %cst_133 = arith.constant 5.000000e-01 : f32
    %258 = vector.broadcast %cst_133 : f32 to vector<32x64xf32>
    %259 = arith.mulf %258, %257 : vector<32x64xf32>
    %260 = arith.mulf %247, %259 : vector<32x64xf32>
    %261 = arith.truncf %260 : vector<32x64xf32> to vector<32x64xbf16>
    %c1_134 = arith.constant 1 : index
    %c0_135 = arith.constant 0 : index
    %c0_136 = arith.constant 0 : index
    %262 = vector.load %arg13[%c1_134, %c0_135, %c0_136] : memref<2x64x32xbf16, #tpu.memory_space<vmem>>, vector<1x64x32xbf16>
    %263 = vector.shape_cast %262 : vector<1x64x32xbf16> to vector<64x32xbf16>
    %cst_137 = arith.constant dense<0.000000e+00> : vector<32x32xf32>
    %264 = tpu.matmul %261, %263, %cst_137 {dimension_numbers = #tpu.dot_dimension_numbers<[1], [0], [0], [1], [0, 0, 1, 1], [], []>} : vector<32x64xbf16>, vector<64x32xbf16>, vector<32x32xf32> -> vector<32x32xf32>
    %c1_138 = arith.constant 1 : index
    %c6_139 = arith.constant 6 : index
    %c0_140 = arith.constant 0 : index
    %265 = vector.load %arg10[%c1_138, %c6_139, %c0_140] : memref<2x9x32xf32, #tpu.memory_space<vmem>>, vector<1x1x32xf32>
    %266 = vector.shape_cast %265 : vector<1x1x32xf32> to vector<1x32xf32>
    %267 = vector.broadcast %266 : vector<1x32xf32> to vector<32x32xf32>
    %268 = arith.addf %264, %267 : vector<32x32xf32>
    %269 = arith.addf %239, %268 : vector<32x32xf32>
    %c1_141 = arith.constant 1 : index
    %c7_142 = arith.constant 7 : index
    %c0_143 = arith.constant 0 : index
    %270 = vector.load %arg10[%c1_141, %c7_142, %c0_143] : memref<2x9x32xf32, #tpu.memory_space<vmem>>, vector<1x1x32xf32>
    %271 = vector.shape_cast %270 : vector<1x1x32xf32> to vector<1x32xf32>
    %c1_144 = arith.constant 1 : index
    %c8_145 = arith.constant 8 : index
    %c0_146 = arith.constant 0 : index
    %272 = vector.load %arg10[%c1_144, %c8_145, %c0_146] : memref<2x9x32xf32, #tpu.memory_space<vmem>>, vector<1x1x32xf32>
    %273 = vector.shape_cast %272 : vector<1x1x32xf32> to vector<1x32xf32>
    %cst_147 = arith.constant dense<0.000000e+00> : vector<32xf32>
    %274 = vector.multi_reduction <add>, %269, %cst_147 [1] : vector<32x32xf32> to vector<32xf32>
    %275 = vector.shape_cast %274 : vector<32xf32> to vector<32x1xf32>
    %cst_148 = arith.constant 3.200000e+01 : f32
    %276 = vector.broadcast %cst_148 : f32 to vector<32x1xf32>
    %277 = arith.divf %275, %276 : vector<32x1xf32>
    %278 = vector.broadcast %277 : vector<32x1xf32> to vector<32x32xf32>
    %279 = arith.subf %269, %278 : vector<32x32xf32>
    %280 = arith.mulf %279, %279 : vector<32x32xf32>
    %cst_149 = arith.constant dense<0.000000e+00> : vector<32xf32>
    %281 = vector.multi_reduction <add>, %280, %cst_149 [1] : vector<32x32xf32> to vector<32xf32>
    %282 = vector.shape_cast %281 : vector<32xf32> to vector<32x1xf32>
    %cst_150 = arith.constant 3.200000e+01 : f32
    %283 = vector.broadcast %cst_150 : f32 to vector<32x1xf32>
    %284 = arith.divf %282, %283 : vector<32x1xf32>
    %285 = vector.broadcast %277 : vector<32x1xf32> to vector<32x32xf32>
    %286 = arith.subf %269, %285 : vector<32x32xf32>
    %cst_151 = arith.constant 9.99999996E-13 : f32
    %287 = vector.broadcast %cst_151 : f32 to vector<32x1xf32>
    %288 = arith.addf %284, %287 : vector<32x1xf32>
    %289 = math.rsqrt %288 : vector<32x1xf32>
    %290 = vector.broadcast %289 : vector<32x1xf32> to vector<32x32xf32>
    %291 = arith.mulf %286, %290 : vector<32x32xf32>
    %292 = vector.broadcast %271 : vector<1x32xf32> to vector<32x32xf32>
    %293 = arith.mulf %291, %292 : vector<32x32xf32>
    %294 = vector.broadcast %273 : vector<1x32xf32> to vector<32x32xf32>
    %295 = arith.addf %293, %294 : vector<32x32xf32>
    %c0_152 = arith.constant 0 : index
    %c0_153 = arith.constant 0 : index
    %296 = vector.load %arg5[%c0_152, %c0_153] : memref<8x32xf32, #tpu.memory_space<vmem>>, vector<8x32xf32>
    %cst_154 = arith.constant dense<0.000000e+00> : vector<8x32xf32>
    %297 = tpu.matmul %296, %295, %cst_154 {dimension_numbers = #tpu.dot_dimension_numbers<[1], [0], [0], [1], [0, 0, 1, 1], [], []>} : vector<8x32xf32>, vector<32x32xf32>, vector<8x32xf32> -> vector<8x32xf32>
    %c0_155 = arith.constant 0 : index
    %c0_156 = arith.constant 0 : index
    %298 = vector.load %arg14[%c0_155, %c0_156] : memref<8x32xf32, #tpu.memory_space<vmem>>, vector<8x32xf32>
    tpu.vector_store %arg14[%c0_155, %c0_156], %297 {strides = array<i32>} : memref<8x32xf32, #tpu.memory_space<vmem>>, vector<8x32xf32>,
    return
  }
}

</mosaic_0001>

<llo_original>
// kernel: eq.25
$region0: #{eq.25}
  %s0 = inlined_call_operand.vmem [shape: s32[2,16], index: 0, kind: input, shape index: {}]
  %s1 = inlined_call_operand.vmem [shape: s32[32], index: 1, kind: output, shape index: {}]
  $region1: #{eq.25} parent=0
    #allocation0 [shape = 'u8[4096]{0}', space=vmem, size = 0x1000, scoped, tag = 'scoped mem for output reshape']
    #allocation1 [shape = 'u8[4096]{0}', space=vmem, size = 0x1000, scoped, tag = 'scoped mem for input reshape']
    %s3 = ssub.s32 4, 1
    %v4 = vld [vmem:[%s0] sm:%s3]
    %5 = vst [vmem:[#allocation1] sm:%s3] %v4
    %v6 = vld [vmem:[#allocation1] sm:$0x1]
    %vm7 = vcmask 130048
    %8 = vst.msk [vmem:[#allocation0] sm:$0x1] %vm7, %v6
    %s9 = scalar_lea.vmem [#allocation1], 1
    %v10 = vld [vmem:[%s9] sm:$0x1]
    %11 = vrot.lane.b32.xlu0 %v10, 16
    %v12 = vpop.permute.xlu0 %11
    %vm13 = vcmask 261248
    %14 = vst.msk [vmem:[#allocation0] sm:$0x1] %vm13, %v12
    %s16 = ssub.s32 2, 1
    %v17 = vld [vmem:[#allocation0] sm:%s16]
    %s19 = ssub.s32 2, 1
    %20 = vst [vmem:[%s1] sm:%s19] %v17

// kernel: context_encoder_forward.1
$region0: #{context_encoder_forward.1}
  #allocation0 [shape = 'u32[]', space=smem, size = 0x4, offset = 0x4, fixed_abs, tag = 'smem constant byte address 0x4 - core index']
  #allocation1 [shape = 'u32[72,128]{1,0:T(1,128)}', space=vmem, size = 0x9000, scoped, tag = 'internal scratch']
  %s0 = inlined_call_operand.vmem [shape: s32[32,1], index: 0, kind: input, shape index: {}]
  %s1 = inlined_call_operand.hbm [shape: bf16[64,32], index: 1, kind: input, shape index: {}]
  %s2 = inlined_call_operand.vmem [shape: f32[32,32], index: 2, kind: input, shape index: {}]
  %s3 = inlined_call_operand.vmem [shape: f32[2,32], index: 3, kind: input, shape index: {}]
  %s4 = inlined_call_operand.vmem [shape: f32[32,32], index: 4, kind: input, shape index: {}]
  %s5 = inlined_call_operand.vmem [shape: f32[8,32], index: 5, kind: input, shape index: {}]
  %s6 = inlined_call_operand.hbm [shape: bf16[2,32,32], index: 6, kind: input, shape index: {}]
  %s7 = inlined_call_operand.hbm [shape: bf16[2,32,32], index: 7, kind: input, shape index: {}]
  %s8 = inlined_call_operand.hbm [shape: bf16[2,32,32], index: 8, kind: input, shape index: {}]
  %s9 = inlined_call_operand.hbm [shape: bf16[2,32,32], index: 9, kind: input, shape index: {}]
  %s10 = inlined_call_operand.vmem [shape: f32[2,9,32], index: 10, kind: input, shape index: {}]
  %s11 = inlined_call_operand.vmem [shape: bf16[2,32,64], index: 11, kind: input, shape index: {}]
  %s12 = inlined_call_operand.vmem [shape: f32[2,1,64], index: 12, kind: input, shape index: {}]
  %s13 = inlined_call_operand.vmem [shape: bf16[2,64,32], index: 13, kind: input, shape index: {}]
  %s14 = inlined_call_operand.hbm [shape: f32[8,32], index: 14, kind: output, shape index: {}]
  %s15 = sld [smem:[#allocation0]]
  $region86: #{context_encoder_forward.1} parent=0
    _
  %s17 = ssub.s32 1, %s15
  %s18 = scalar_select 0, %s17, %s15
  $region1: #{context_encoder_forward.1} parent=0
    #allocation2 [shape = 'u8[16384]{0}', space=vmem, size = 0x4000, scoped, tag = 'input window, operand 1, single buffered']
    #allocation3 [shape = 's32[1]{0}', space=sflag, size = 0x4, scoped, tag = 'scoped memory for context_encoder_forward.1']
    #allocation4 [shape = 's32[1]{0}', space=sflag, size = 0x4, scoped, tag = 'scoped memory for context_encoder_forward.1']
    #allocation5 [shape = 'u8[16384]{0}', space=vmem, size = 0x4000, scoped, tag = 'input window, operand 6, single buffered']
    #allocation6 [shape = 's32[1]{0}', space=sflag, size = 0x4, scoped, tag = 'scoped memory for context_encoder_forward.1']
    #allocation7 [shape = 'u8[16384]{0}', space=vmem, size = 0x4000, scoped, tag = 'input window, operand 7, single buffered']
    #allocation8 [shape = 'u8[16384]{0}', space=vmem, size = 0x4000, scoped, tag = 'input window, operand 8, single buffered']
    #allocation9 [shape = 's32[1]{0}', space=sflag, size = 0x4, scoped, tag = 'scoped memory for context_encoder_forward.1']
    #allocation10 [shape = 'u8[16384]{0}', space=vmem, size = 0x4000, scoped, tag = 'input window, operand 9, single buffered']
    #allocation11 [shape = 'u8[4096]{0}', space=vmem, size = 0x1000, scoped, tag = 'output window, operand 0, single buffered']
    %19 = vsyncpa [#allocation3], 0
    %20 = vsyncpa [#allocation6], 0
    %21 = vsyncpa [#allocation9], 0
    %22 = vsyncpa [#allocation4], 0
    // Predicated region
    $region2: #{context_encoder_forward.1} parent=1 // pred_check
      _
    $region3: #{context_encoder_forward.1} parent=1 // pred_check_branch
      %24 = sbr.rel (0) target = $region5
    $region4: #{context_encoder_forward.1} parent=1 // pred_region
      _
    $region5: #{context_encoder_forward.1} parent=1 // pred_fallthru
      _
    // Predicated region
    $region6: #{context_encoder_forward.1} parent=1 // pred_check
      _
    $region7: #{context_encoder_forward.1} parent=1 // pred_check_branch
      %26 = sbr.rel (0) target = $region9
    $region8: #{context_encoder_forward.1} parent=1 // pred_region
      %28 = vsyncadd [#allocation3], 0
      %s29 = sshll.u32 %s1, 4
      %s30 = int_to_ptr.hbm [resolvable:$true] %s29
      %s31 = sshll.u32 [#allocation2], 4
      %s32 = int_to_ptr.vmem [resolvable:$true] %s31
      %37 = dma.hbm_to_vmem [thread:$0]  %s30, 512, %s32, [#allocation3], 64, 64, 4
    $region9: #{context_encoder_forward.1} parent=1 // pred_fallthru
      _
    // Predicated region
    $region10: #{context_encoder_forward.1} parent=1 // pred_check
      _
    $region11: #{context_encoder_forward.1} parent=1 // pred_check_branch
      %39 = sbr.rel (0) target = $region13
    $region12: #{context_encoder_forward.1} parent=1 // pred_region
      _
    $region13: #{context_encoder_forward.1} parent=1 // pred_fallthru
      _
    // Predicated region
    $region14: #{context_encoder_forward.1} parent=1 // pred_check
      _
    $region15: #{context_encoder_forward.1} parent=1 // pred_check_branch
      %41 = sbr.rel (0) target = $region17
    $region16: #{context_encoder_forward.1} parent=1 // pred_region
      _
    $region17: #{context_encoder_forward.1} parent=1 // pred_fallthru
      _
    // Predicated region
    $region18: #{context_encoder_forward.1} parent=1 // pred_check
      _
    $region19: #{context_encoder_forward.1} parent=1 // pred_check_branch
      %43 = sbr.rel (0) target = $region21
    $region20: #{context_encoder_forward.1} parent=1 // pred_region
      _
    $region21: #{context_encoder_forward.1} parent=1 // pred_fallthru
      _
    // Predicated region
    $region22: #{context_encoder_forward.1} parent=1 // pred_check
      _
    $region23: #{context_encoder_forward.1} parent=1 // pred_check_branch
      %45 = sbr.rel (0) target = $region25
    $region24: #{context_encoder_forward.1} parent=1 // pred_region
      _
    $region25: #{context_encoder_forward.1} parent=1 // pred_fallthru
      _
    // Predicated region
    $region26: #{context_encoder_forward.1} parent=1 // pred_check
      _
    $region27: #{context_encoder_forward.1} parent=1 // pred_check_branch
      %47 = sbr.rel (0) target = $region29
    $region28: #{context_encoder_forward.1} parent=1 // pred_region
      %49 = vsyncadd [#allocation6], 0
      %s50 = sshll.u32 %s6, 4
      %s51 = int_to_ptr.hbm [resolvable:$true] %s50
      %s52 = sshll.u32 [#allocation5], 4
      %s53 = int_to_ptr.vmem [resolvable:$true] %s52
      %58 = dma.hbm_to_vmem [thread:$0]  %s51, 512, %s53, [#allocation6], 64, 64, 4
    $region29: #{context_encoder_forward.1} parent=1 // pred_fallthru
      _
    // Predicated region
    $region30: #{context_encoder_forward.1} parent=1 // pred_check
      _
    $region31: #{context_encoder_forward.1} parent=1 // pred_check_branch
      %60 = sbr.rel (0) target = $region33
    $region32: #{context_encoder_forward.1} parent=1 // pred_region
      %62 = vsyncadd [#allocation6], 0
      %s63 = sshll.u32 %s7, 4
      %s64 = int_to_ptr.hbm [resolvable:$true] %s63
      %s65 = sshll.u32 [#allocation7], 4
      %s66 = int_to_ptr.vmem [resolvable:$true] %s65
      %71 = dma.hbm_to_vmem [thread:$0]  %s64, 512, %s66, [#allocation6], 64, 64, 4
    $region33: #{context_encoder_forward.1} parent=1 // pred_fallthru
      _
    // Predicated region
    $region34: #{context_encoder_forward.1} parent=1 // pred_check
      _
    $region35: #{context_encoder_forward.1} parent=1 // pred_check_branch
      %73 = sbr.rel (0) target = $region37
    $region36: #{context_encoder_forward.1} parent=1 // pred_region
      %75 = vsyncadd [#allocation9], 0
      %s76 = sshll.u32 %s8, 4
      %s77 = int_to_ptr.hbm [resolvable:$true] %s76
      %s78 = sshll.u32 [#allocation8], 4
      %s79 = int_to_ptr.vmem [resolvable:$true] %s78
      %84 = dma.hbm_to_vmem [thread:$0]  %s77, 512, %s79, [#allocation9], 64, 64, 4
    $region37: #{context_encoder_forward.1} parent=1 // pred_fallthru
      _
    // Predicated region
    $region38: #{context_encoder_forward.1} parent=1 // pred_check
      _
    $region39: #{context_encoder_forward.1} parent=1 // pred_check_branch
      %86 = sbr.rel (0) target = $region41
    $region40: #{context_encoder_forward.1} parent=1 // pred_region
      %88 = vsyncadd [#allocation9], 0
      %s89 = sshll.u32 %s9, 4
      %s90 = int_to_ptr.hbm [resolvable:$true] %s89
      %s91 = sshll.u32 [#allocation10], 4
      %s92 = int_to_ptr.vmem [resolvable:$true] %s91
      %97 = dma.hbm_to_vmem [thread:$0]  %s90, 512, %s92, [#allocation9], 64, 64, 4
    $region41: #{context_encoder_forward.1} parent=1 // pred_fallthru
      _
    // Predicated region
    $region42: #{context_encoder_forward.1} parent=1 // pred_check
      _
    $region43: #{context_encoder_forward.1} parent=1 // pred_check_branch
      %99 = sbr.rel (0) target = $region45
    $region44: #{context_encoder_forward.1} parent=1 // pred_region
      _
    $region45: #{context_encoder_forward.1} parent=1 // pred_fallthru
      _
    // Predicated region
    $region46: #{context_encoder_forward.1} parent=1 // pred_check
      _
    $region47: #{context_encoder_forward.1} parent=1 // pred_check_branch
      %101 = sbr.rel (0) target = $region49
    $region48: #{context_encoder_forward.1} parent=1 // pred_region
      _
    $region49: #{context_encoder_forward.1} parent=1 // pred_fallthru
      _
    // Predicated region
    $region50: #{context_encoder_forward.1} parent=1 // pred_check
      _
    $region51: #{context_encoder_forward.1} parent=1 // pred_check_branch
      %103 = sbr.rel (0) target = $region53
    $region52: #{context_encoder_forward.1} parent=1 // pred_region
      _
    $region53: #{context_encoder_forward.1} parent=1 // pred_fallthru
      _
    // Predicated region
    $region54: #{context_encoder_forward.1} parent=1 // pred_check
      _
    $region55: #{context_encoder_forward.1} parent=1 // pred_check_branch
      %105 = sbr.rel (0) target = $region57
    $region56: #{context_encoder_forward.1} parent=1 // pred_region
      _
    $region57: #{context_encoder_forward.1} parent=1 // pred_fallthru
      _
    // Predicated region
    $region58: #{context_encoder_forward.1} parent=1 // pred_check
      _
    $region59: #{context_encoder_forward.1} parent=1 // pred_check_branch
      %107 = sbr.rel (0) target = $region61
    $region60: #{context_encoder_forward.1} parent=1 // pred_region
      %109 = dma.done [#allocation3], 512
    $region61: #{context_encoder_forward.1} parent=1 // pred_fallthru
      _
    // Predicated region
    $region62: #{context_encoder_forward.1} parent=1 // pred_check
      _
    $region63: #{context_encoder_forward.1} parent=1 // pred_check_branch
      %111 = sbr.rel (0) target = $region65
    $region64: #{context_encoder_forward.1} parent=1 // pred_region
      %113 = dma.done [#allocation6], 512
    $region65: #{context_encoder_forward.1} parent=1 // pred_fallthru
      _
    // Predicated region
    $region66: #{context_encoder_forward.1} parent=1 // pred_check
      _
    $region67: #{context_encoder_forward.1} parent=1 // pred_check_branch
      %115 = sbr.rel (0) target = $region69
    $region68: #{context_encoder_forward.1} parent=1 // pred_region
      %117 = dma.done [#allocation6], 512
    $region69: #{context_encoder_forward.1} parent=1 // pred_fallthru
      _
    // Predicated region
    $region70: #{context_encoder_forward.1} parent=1 // pred_check
      _
    $region71: #{context_encoder_forward.1} parent=1 // pred_check_branch
      %119 = sbr.rel (0) target = $region73
    $region72: #{context_encoder_forward.1} parent=1 // pred_region
      %121 = dma.done [#allocation9], 512
    $region73: #{context_encoder_forward.1} parent=1 // pred_fallthru
      _
    // Predicated region
    $region74: #{context_encoder_forward.1} parent=1 // pred_check
      _
    $region75: #{context_encoder_forward.1} parent=1 // pred_check_branch
      %123 = sbr.rel (0) target = $region77
    $region76: #{context_encoder_forward.1} parent=1 // pred_region
      %125 = dma.done [#allocation9], 512
    $region77: #{context_encoder_forward.1} parent=1 // pred_fallthru
      _
    %v127 = vld [vmem:[%s0] sm:$0xff]
    %v128 = vld [vmem:[%s0 + $0x8] sm:$0xff]
    %v129 = vld [vmem:[%s0 + $0x10] sm:$0xff]
    %v130 = vld [vmem:[%s0 + $0x18] sm:$0xff]
    %v131 = vlaneseq
    %v132 = vand.u32 %v131, 127
    %133 = vset.pattern.permute.xlu0 0
    %134 = vperm.xlu0 %133, %v127
    %v135 = vpop.permute.xlu0 %134
    %136 = vset.pattern.permute.xlu0 0
    %137 = vperm.xlu0 %136, %v128
    %v138 = vpop.permute.xlu0 %137
    %139 = vset.pattern.permute.xlu0 0
    %140 = vperm.xlu0 %139, %v129
    %v141 = vpop.permute.xlu0 %140
    %142 = vset.pattern.permute.xlu0 0
    %143 = vperm.xlu0 %142, %v130
    %v144 = vpop.permute.xlu0 %143
    %vm145 = vcmp.eq.s32.totalorder %v132, %v135
    %vm146 = vcmp.eq.s32.totalorder %v132, %v138
    %vm147 = vcmp.eq.s32.totalorder %v132, %v141
    %vm148 = vcmp.eq.s32.totalorder %v132, %v144
    %v149 = vsel %vm145, 1, 0
    %v150 = vsel %vm146, 1, 0
    %v151 = vsel %vm147, 1, 0
    %v152 = vsel %vm148, 1, 0
    %v153 = vcvt.s32.f32 %v149
    %v154 = vcvt.s32.f32 %v150
    %v155 = vcvt.s32.f32 %v151
    %v156 = vcvt.s32.f32 %v152
    %v157 = vpack.c.bf16 %v154, %v153
    %v158 = vpack.c.bf16 %v156, %v155
    %v159 = vld [vmem:[#allocation2] sm:$0xf]
    %v160 = vld [vmem:[#allocation2 + $0x4] sm:$0xf]
    %v161 = vld [vmem:[#allocation2 + $0x8] sm:$0xf]
    %v162 = vld [vmem:[#allocation2 + $0xc] sm:$0xf]
    %v163 = vld [vmem:[#allocation2 + $0x10] sm:$0xf]
    %v164 = vld [vmem:[#allocation2 + $0x14] sm:$0xf]
    %v165 = vld [vmem:[#allocation2 + $0x18] sm:$0xf]
    %v166 = vld [vmem:[#allocation2 + $0x1c] sm:$0xf]
    %v167 = vld [vmem:[%s2] sm:$0xff]
    %v168 = vld [vmem:[%s2 + $0x8] sm:$0xff]
    %v169 = vld [vmem:[%s2 + $0x10] sm:$0xff]
    %v170 = vld [vmem:[%s2 + $0x18] sm:$0xff]
    %v179 = vunpack.c.l.b16 %v159
    %v180 = vunpack.c.l.b16 %v160
    %v181 = vunpack.c.l.b16 %v161
    %v182 = vunpack.c.l.b16 %v162
    %v183 = vunpack.c.l.b16 %v163
    %v184 = vunpack.c.l.b16 %v164
    %v185 = vunpack.c.l.b16 %v165
    %v186 = vunpack.c.l.b16 %v166
    %v187 = vpack.c.b16 %v180, %v179
    %v188 = vpack.c.b16 %v182, %v181
    %v189 = vpack.c.b16 %v184, %v183
    %v190 = vpack.c.b16 %v186, %v185
    %vm195 = vcmask 523264
    %v197 = vsel %vm195, %v157, 0
    %v200 = vsel %vm195, %v158, 0
    %202 = vmatpush.bf16.msra.mxu0 0
    %203 = vmatpush.bf16.msra.mxu0 0
    %204 = vmatpush.bf16.msra.mxu0 0
    %205 = vmatpush.bf16.msra.mxu0 0
    %206 = vmatpush.bf16.msra.mxu0 %v190
    %207 = vmatpush.bf16.msra.mxu0 %v189
    %208 = vmatpush.bf16.msra.mxu0 %v188
    %209 = vmatpush.bf16.msra.mxu0 %v187
    %210 = vmatmul.bf16.gmra.mxu0 %v197
    %v211 = vpop.f32.mrf.mxu0
    %v212 = vadd.f32 %v167, %v211
    %v213 = vpop.f32.mrf.mxu0
    %v214 = vadd.f32 %v168, %v213
    %215 = vmatmul.bf16.gmra.mxu0 %v200
    %v216 = vpop.f32.mrf.mxu0
    %v217 = vadd.f32 %v169, %v216
    %v218 = vpop.f32.mrf.mxu0
    %v219 = vadd.f32 %v170, %v218
    %220 = vdwg.mxu0
    %v221 = vld [vmem:[%s3] sm:$0x1]
    %v222 = vld [vmem:[%s3 + $0x1] sm:$0x1]
    %vm223 = vcmask 261120
    %v224 = vsel %vm223, %v212, 0.0
    %225 = vadd.xlane.f32.xlu0 %v224
    %v226 = vpop.xlane.xlu0 %225
    %v227 = vsel %vm223, %v214, 0.0
    %228 = vadd.xlane.f32.xlu0 %v227
    %v229 = vpop.xlane.xlu0 %228
    %v230 = vsel %vm223, %v217, 0.0
    %231 = vadd.xlane.f32.xlu0 %v230
    %v232 = vpop.xlane.xlu0 %231
    %v233 = vsel %vm223, %v219, 0.0
    %234 = vadd.xlane.f32.xlu0 %v233
    %v235 = vpop.xlane.xlu0 %234
    %v236 = vrcp.pop 32.0
    %v237 = vmul.f32 32.0, %v236
    %v238 = vsub.f32 1.0, %v237
    %v239 = vmul.f32 %v236, %v238
    %v240 = vadd.f32 %v236, %v239
    %vm241 = vweird.f32 %v236
    %v242 = vsel %vm241, %v236, %v240
    %v243 = vmul.f32 %v226, %v242
    %v244 = vmul.f32 %v229, %v242
    %v245 = vmul.f32 %v232, %v242
    %v246 = vmul.f32 %v235, %v242
    %v247 = vsub.f32 %v212, %v243
    %v248 = vsub.f32 %v214, %v244
    %v249 = vsub.f32 %v217, %v245
    %v250 = vsub.f32 %v219, %v246
    %v251 = vmul.f32 %v247, %v247
    %v252 = vmul.f32 %v248, %v248
    %v253 = vmul.f32 %v249, %v249
    %v254 = vmul.f32 %v250, %v250
    %v255 = vsel %vm223, %v251, 0.0
    %256 = vadd.xlane.f32.xlu0 %v255
    %v257 = vpop.xlane.xlu0 %256
    %v258 = vsel %vm223, %v252, 0.0
    %259 = vadd.xlane.f32.xlu0 %v258
    %v260 = vpop.xlane.xlu0 %259
    %v261 = vsel %vm223, %v253, 0.0
    %262 = vadd.xlane.f32.xlu0 %v261
    %v263 = vpop.xlane.xlu0 %262
    %v264 = vsel %vm223, %v254, 0.0
    %265 = vadd.xlane.f32.xlu0 %v264
    %v266 = vpop.xlane.xlu0 %265
    %v267 = vmul.f32 %v257, %v242
    %v268 = vmul.f32 %v260, %v242
    %v269 = vmul.f32 %v263, %v242
    %v270 = vmul.f32 %v266, %v242
    %v271 = vadd.f32 %v267, 1e-12
    %v272 = vadd.f32 %v268, 1e-12
    %v273 = vadd.f32 %v269, 1e-12
    %v274 = vadd.f32 %v270, 1e-12
    %v275 = vrsqrt.pop %v271
    %v276 = vmul.f32 %v275, %v271
    %v277 = vmul.f32 %v276, %v275
    %v278 = vmul.f32 0.5, %v277
    %v279 = vsub.f32 1.5, %v278
    %v280 = vmul.f32 %v275, %v279
    %vm281 = vweird.f32 %v271
    %vm282 = vweird.f32 %v275
    %vm283 = vmor %vm281, %vm282
    %v284 = vsel %vm283, %v275, %v280
    %v285 = vrsqrt.pop %v272
    %v286 = vmul.f32 %v285, %v272
    %v287 = vmul.f32 %v286, %v285
    %v288 = vmul.f32 0.5, %v287
    %v289 = vsub.f32 1.5, %v288
    %v290 = vmul.f32 %v285, %v289
    %vm291 = vweird.f32 %v272
    %vm292 = vweird.f32 %v285
    %vm293 = vmor %vm291, %vm292
    %v294 = vsel %vm293, %v285, %v290
    %v295 = vrsqrt.pop %v273
    %v296 = vmul.f32 %v295, %v273
    %v297 = vmul.f32 %v296, %v295
    %v298 = vmul.f32 0.5, %v297
    %v299 = vsub.f32 1.5, %v298
    %v300 = vmul.f32 %v295, %v299
    %vm301 = vweird.f32 %v273
    %vm302 = vweird.f32 %v295
    %vm303 = vmor %vm301, %vm302
    %v304 = vsel %vm303, %v295, %v300
    %v305 = vrsqrt.pop %v274
    %v306 = vmul.f32 %v305, %v274
    %v307 = vmul.f32 %v306, %v305
    %v308 = vmul.f32 0.5, %v307
    %v309 = vsub.f32 1.5, %v308
    %v310 = vmul.f32 %v305, %v309
    %vm311 = vweird.f32 %v274
    %vm312 = vweird.f32 %v305
    %vm313 = vmor %vm311, %vm312
    %v314 = vsel %vm313, %v305, %v310
    %v315 = vmul.f32 %v247, %v284
    %v316 = vmul.f32 %v248, %v294
    %v317 = vmul.f32 %v249, %v304
    %v318 = vmul.f32 %v250, %v314
    %v319 = vperm.slane %v221, 0
    %v320 = vmul.f32 %v315, %v319
    %v321 = vmul.f32 %v316, %v319
    %v322 = vmul.f32 %v317, %v319
    %v323 = vmul.f32 %v318, %v319
    %v324 = vperm.slane %v222, 0
    %v325 = vadd.f32 %v320, %v324
    %v326 = vadd.f32 %v321, %v324
    %v327 = vadd.f32 %v322, %v324
    %v328 = vadd.f32 %v323, %v324
    %v329 = vld [vmem:[%s4] sm:$0xff]
    %v330 = vld [vmem:[%s4 + $0x8] sm:$0xff]
    %v331 = vld [vmem:[%s4 + $0x10] sm:$0xff]
    %v332 = vld [vmem:[%s4 + $0x18] sm:$0xff]
    %v333 = vpack.c.bf16 %v326, %v325
    %v334 = vpack.c.bf16 %v328, %v327
    %v335 = vld [vmem:[#allocation5] sm:$0xf]
    %v336 = vld [vmem:[#allocation5 + $0x4] sm:$0xf]
    %v337 = vld [vmem:[#allocation5 + $0x8] sm:$0xf]
    %v338 = vld [vmem:[#allocation5 + $0xc] sm:$0xf]
    %v339 = vld [vmem:[%s10] sm:$0x1]
    %v340 = vperm.slane %v339, 0
    %v345 = vunpack.c.l.b16 %v335
    %v346 = vunpack.c.l.b16 %v336
    %v347 = vunpack.c.l.b16 %v337
    %v348 = vunpack.c.l.b16 %v338
    %v349 = vpack.c.b16 %v346, %v345
    %v350 = vpack.c.b16 %v348, %v347
    %v354 = vsel %vm223, %v333, 0
    %v357 = vsel %vm223, %v334, 0
    %359 = vmatpush.bf16.msra.mxu0 0
    %360 = vmatpush.bf16.msra.mxu0 0
    %361 = vmatpush.bf16.msra.mxu0 0
    %362 = vmatpush.bf16.msra.mxu0 0
    %363 = vmatpush.bf16.msra.mxu0 0
    %364 = vmatpush.bf16.msra.mxu0 0
    %365 = vmatpush.bf16.msra.mxu0 %v350
    %366 = vmatpush.bf16.msra.mxu0 %v349
    %367 = vmatmul.bf16.gmra.mxu0 %v354
    %v368 = vpop.f32.mrf.mxu0
    %v369 = vadd.f32 %v340, %v368
    %v370 = vpop.f32.mrf.mxu0
    %v371 = vadd.f32 %v340, %v370
    %372 = vmatmul.bf16.gmra.mxu0 %v357
    %v373 = vpop.f32.mrf.mxu0
    %v374 = vadd.f32 %v340, %v373
    %v375 = vpop.f32.mrf.mxu0
    %v376 = vadd.f32 %v340, %v375
    %377 = vdwg.mxu0
    %v378 = vld [vmem:[#allocation7] sm:$0xf]
    %v379 = vld [vmem:[#allocation7 + $0x4] sm:$0xf]
    %v380 = vld [vmem:[#allocation7 + $0x8] sm:$0xf]
    %v381 = vld [vmem:[#allocation7 + $0xc] sm:$0xf]
    %v382 = vld [vmem:[%s10 + $0x1] sm:$0x1]
    %v383 = vperm.slane %v382, 0
    %v388 = vunpack.c.l.b16 %v378
    %v389 = vunpack.c.l.b16 %v379
    %v390 = vunpack.c.l.b16 %v380
    %v391 = vunpack.c.l.b16 %v381
    %v392 = vpack.c.b16 %v389, %v388
    %v393 = vpack.c.b16 %v391, %v390
    %396 = vmatpush.bf16.msra.mxu0 0
    %397 = vmatpush.bf16.msra.mxu0 0
    %398 = vmatpush.bf16.msra.mxu0 0
    %399 = vmatpush.bf16.msra.mxu0 0
    %400 = vmatpush.bf16.msra.mxu0 0
    %401 = vmatpush.bf16.msra.mxu0 0
    %402 = vmatpush.bf16.msra.mxu0 %v393
    %403 = vmatpush.bf16.msra.mxu0 %v392
    %404 = vmatmul.bf16.gmra.mxu0 %v354
    %v405 = vpop.f32.mrf.mxu0
    %v406 = vadd.f32 %v383, %v405
    %v407 = vpop.f32.mrf.mxu0
    %v408 = vadd.f32 %v383, %v407
    %409 = vmatmul.bf16.gmra.mxu0 %v357
    %v410 = vpop.f32.mrf.mxu0
    %v411 = vadd.f32 %v383, %v410
    %v412 = vpop.f32.mrf.mxu0
    %v413 = vadd.f32 %v383, %v412
    %414 = vdwg.mxu0
    %v415 = vld [vmem:[#allocation8] sm:$0xf]
    %v416 = vld [vmem:[#allocation8 + $0x4] sm:$0xf]
    %v417 = vld [vmem:[#allocation8 + $0x8] sm:$0xf]
    %v418 = vld [vmem:[#allocation8 + $0xc] sm:$0xf]
    %v419 = vld [vmem:[%s10 + $0x2] sm:$0x1]
    %v420 = vperm.slane %v419, 0
    %v425 = vunpack.c.l.b16 %v415
    %v426 = vunpack.c.l.b16 %v416
    %v427 = vunpack.c.l.b16 %v417
    %v428 = vunpack.c.l.b16 %v418
    %v429 = vpack.c.b16 %v426, %v425
    %v430 = vpack.c.b16 %v428, %v427
    %433 = vmatpush.bf16.msra.mxu0 0
    %434 = vmatpush.bf16.msra.mxu0 0
    %435 = vmatpush.bf16.msra.mxu0 0
    %436 = vmatpush.bf16.msra.mxu0 0
    %437 = vmatpush.bf16.msra.mxu0 0
    %438 = vmatpush.bf16.msra.mxu0 0
    %439 = vmatpush.bf16.msra.mxu0 %v430
    %440 = vmatpush.bf16.msra.mxu0 %v429
    %441 = vmatmul.bf16.gmra.mxu0 %v354
    %v442 = vpop.f32.mrf.mxu0
    %v443 = vadd.f32 %v420, %v442
    %v444 = vpop.f32.mrf.mxu0
    %v445 = vadd.f32 %v420, %v444
    %446 = vmatmul.bf16.gmra.mxu0 %v357
    %v447 = vpop.f32.mrf.mxu0
    %v448 = vadd.f32 %v420, %v447
    %v449 = vpop.f32.mrf.mxu0
    %v450 = vadd.f32 %v420, %v449
    %451 = vdwg.mxu0
    %v452 = vpack.c.bf16 %v371, %v369
    %v453 = vpack.c.bf16 %v376, %v374
    %v454 = vpack.c.bf16 %v408, %v406
    %v455 = vpack.c.bf16 %v413, %v411
    %v457 = vsel %vm223, %v452, 0
    %v460 = vsel %vm223, %v453, 0
    %v463 = vsel %vm223, %v454, 0
    %v466 = vsel %vm223, %v455, 0
    %468 = vmatpush.bf16.xpose.msra.mxu0 0
    %469 = vmatpush.bf16.xpose.msra.mxu0 0
    %470 = vmatpush.bf16.xpose.msra.mxu0 0
    %471 = vmatpush.bf16.xpose.msra.mxu0 0
    %472 = vmatpush.bf16.xpose.msra.mxu0 0
    %473 = vmatpush.bf16.xpose.msra.mxu0 0
    %474 = vmatpush.bf16.xpose.msra.mxu0 %v466
    %475 = vmatpush.bf16.xpose.msra.mxu0 %v463
    %476 = vmatmul.bf16.gmra.mxu0 %v457
    %v477 = vpop.f32.mrf.mxu0
    %v478 = vadd.f32 %v329, %v477
    %v479 = vpop.f32.mrf.mxu0
    %v480 = vadd.f32 %v330, %v479
    %481 = vmatmul.bf16.gmra.mxu0 %v460
    %v482 = vpop.f32.mrf.mxu0
    %v483 = vadd.f32 %v331, %v482
    %v484 = vpop.f32.mrf.mxu0
    %v485 = vadd.f32 %v332, %v484
    %486 = vdwg.mxu0
    %v487 = vsel %vm223, %v478, -inf
    %488 = vmax.xlane.f32.xlu0 %v487
    %v489 = vpop.xlane.xlu0 %488
    %v490 = vsel %vm223, %v480, -inf
    %491 = vmax.xlane.f32.xlu0 %v490
    %v492 = vpop.xlane.xlu0 %491
    %v493 = vsel %vm223, %v483, -inf
    %494 = vmax.xlane.f32.xlu0 %v493
    %v495 = vpop.xlane.xlu0 %494
    %v496 = vsel %vm223, %v485, -inf
    %497 = vmax.xlane.f32.xlu0 %v496
    %v498 = vpop.xlane.xlu0 %497
    %v499 = vsub.f32 %v478, %v489
    %v500 = vsub.f32 %v480, %v492
    %v501 = vsub.f32 %v483, %v495
    %v502 = vsub.f32 %v485, %v498
    %v503 = vmul.f32 %v499, 1.442695
    %v504 = vpow.pop %v503
    %v505 = vmul.f32 %v500, 1.442695
    %v506 = vpow.pop %v505
    %v507 = vmul.f32 %v501, 1.442695
    %v508 = vpow.pop %v507
    %v509 = vmul.f32 %v502, 1.442695
    %v510 = vpow.pop %v509
    %v511 = vsel %vm223, %v504, 0.0
    %512 = vadd.xlane.f32.xlu0 %v511
    %v513 = vpop.xlane.xlu0 %512
    %v514 = vsel %vm223, %v506, 0.0
    %515 = vadd.xlane.f32.xlu0 %v514
    %v516 = vpop.xlane.xlu0 %515
    %v517 = vsel %vm223, %v508, 0.0
    %518 = vadd.xlane.f32.xlu0 %v517
    %v519 = vpop.xlane.xlu0 %518
    %v520 = vsel %vm223, %v510, 0.0
    %521 = vadd.xlane.f32.xlu0 %v520
    %v522 = vpop.xlane.xlu0 %521
    %v523 = vrcp.pop %v513
    %v524 = vrcp.pop %v516
    %v525 = vrcp.pop %v519
    %v526 = vrcp.pop %v522
    %v527 = vmul.f32 %v504, %v523
    %v528 = vmul.f32 %v506, %v524
    %v529 = vmul.f32 %v508, %v525
    %v530 = vmul.f32 %v510, %v526
    %v531 = vpack.c.bf16 %v528, %v527
    %v532 = vpack.c.bf16 %v530, %v529
    %v533 = vpack.c.bf16 %v445, %v443
    %v534 = vpack.c.bf16 %v450, %v448
    %v536 = vsel %vm223, %v531, 0
    %v539 = vsel %vm223, %v532, 0
    %541 = vmatpush.bf16.msra.mxu0 0
    %542 = vmatpush.bf16.msra.mxu0 0
    %543 = vmatpush.bf16.msra.mxu0 0
    %544 = vmatpush.bf16.msra.mxu0 0
    %545 = vmatpush.bf16.msra.mxu0 0
    %546 = vmatpush.bf16.msra.mxu0 0
    %547 = vmatpush.bf16.msra.mxu0 %v534
    %548 = vmatpush.bf16.msra.mxu0 %v533
    %549 = vmatmul.bf16.gmra.mxu0 %v536
    %v550 = vpop.f32.mrf.mxu0
    %v551 = vadd.f32 0.0, %v550
    %v552 = vpop.f32.mrf.mxu0
    %v553 = vadd.f32 0.0, %v552
    %554 = vmatmul.bf16.gmra.mxu0 %v539
    %v555 = vpop.f32.mrf.mxu0
    %v556 = vadd.f32 0.0, %v555
    %v557 = vpop.f32.mrf.mxu0
    %v558 = vadd.f32 0.0, %v557
    %559 = vdwg.mxu0
    %v560 = vpack.c.bf16 %v553, %v551
    %v561 = vpack.c.bf16 %v558, %v556
    %v562 = vld [vmem:[#allocation10] sm:$0xf]
    %v563 = vld [vmem:[#allocation10 + $0x4] sm:$0xf]
    %v564 = vld [vmem:[#allocation10 + $0x8] sm:$0xf]
    %v565 = vld [vmem:[#allocation10 + $0xc] sm:$0xf]
    %v566 = vld [vmem:[%s10 + $0x3] sm:$0x1]
    %v567 = vperm.slane %v566, 0
    %v572 = vunpack.c.l.b16 %v562
    %v573 = vunpack.c.l.b16 %v563
    %v574 = vunpack.c.l.b16 %v564
    %v575 = vunpack.c.l.b16 %v565
    %v576 = vpack.c.b16 %v573, %v572
    %v577 = vpack.c.b16 %v575, %v574
    %v581 = vsel %vm223, %v560, 0
    %v584 = vsel %vm223, %v561, 0
    %586 = vmatpush.bf16.msra.mxu0 0
    %587 = vmatpush.bf16.msra.mxu0 0
    %588 = vmatpush.bf16.msra.mxu0 0
    %589 = vmatpush.bf16.msra.mxu0 0
    %590 = vmatpush.bf16.msra.mxu0 0
    %591 = vmatpush.bf16.msra.mxu0 0
    %592 = vmatpush.bf16.msra.mxu0 %v577
    %593 = vmatpush.bf16.msra.mxu0 %v576
    %594 = vmatmul.bf16.gmra.mxu0 %v581
    %v595 = vpop.f32.mrf.mxu0
    %v596 = vadd.f32 %v567, %v595
    %v597 = vpop.f32.mrf.mxu0
    %v598 = vadd.f32 %v567, %v597
    %599 = vmatmul.bf16.gmra.mxu0 %v584
    %v600 = vpop.f32.mrf.mxu0
    %v601 = vadd.f32 %v567, %v600
    %v602 = vpop.f32.mrf.mxu0
    %v603 = vadd.f32 %v567, %v602
    %604 = vdwg.mxu0
    %v605 = vadd.f32 %v325, %v596
    %v606 = vadd.f32 %v326, %v598
    %v607 = vadd.f32 %v327, %v601
    %v608 = vadd.f32 %v328, %v603
    %v609 = vld [vmem:[%s10 + $0x4] sm:$0x1]
    %v610 = vld [vmem:[%s10 + $0x5] sm:$0x1]
    %v611 = vsel %vm223, %v605, 0.0
    %612 = vadd.xlane.f32.xlu0 %v611
    %v613 = vpop.xlane.xlu0 %612
    %v614 = vsel %vm223, %v606, 0.0
    %615 = vadd.xlane.f32.xlu0 %v614
    %v616 = vpop.xlane.xlu0 %615
    %v617 = vsel %vm223, %v607, 0.0
    %618 = vadd.xlane.f32.xlu0 %v617
    %v619 = vpop.xlane.xlu0 %618
    %v620 = vsel %vm223, %v608, 0.0
    %621 = vadd.xlane.f32.xlu0 %v620
    %v622 = vpop.xlane.xlu0 %621
    %v623 = vmul.f32 %v613, %v242
    %v624 = vmul.f32 %v616, %v242
    %v625 = vmul.f32 %v619, %v242
    %v626 = vmul.f32 %v622, %v242
    %v627 = vsub.f32 %v605, %v623
    %v628 = vsub.f32 %v606, %v624
    %v629 = vsub.f32 %v607, %v625
    %v630 = vsub.f32 %v608, %v626
    %v631 = vmul.f32 %v627, %v627
    %v632 = vmul.f32 %v628, %v628
    %v633 = vmul.f32 %v629, %v629
    %v634 = vmul.f32 %v630, %v630
    %v635 = vsel %vm223, %v631, 0.0
    %636 = vadd.xlane.f32.xlu0 %v635
    %v637 = vpop.xlane.xlu0 %636
    %v638 = vsel %vm223, %v632, 0.0
    %639 = vadd.xlane.f32.xlu0 %v638
    %v640 = vpop.xlane.xlu0 %639
    %v641 = vsel %vm223, %v633, 0.0
    %642 = vadd.xlane.f32.xlu0 %v641
    %v643 = vpop.xlane.xlu0 %642
    %v644 = vsel %vm223, %v634, 0.0
    %645 = vadd.xlane.f32.xlu0 %v644
    %v646 = vpop.xlane.xlu0 %645
    %v647 = vmul.f32 %v637, %v242
    %v648 = vmul.f32 %v640, %v242
    %v649 = vmul.f32 %v643, %v242
    %v650 = vmul.f32 %v646, %v242
    %v651 = vadd.f32 %v647, 1e-12
    %v652 = vadd.f32 %v648, 1e-12
    %v653 = vadd.f32 %v649, 1e-12
    %v654 = vadd.f32 %v650, 1e-12
    %v655 = vrsqrt.pop %v651
    %v656 = vmul.f32 %v655, %v651
    %v657 = vmul.f32 %v656, %v655
    %v658 = vmul.f32 0.5, %v657
    %v659 = vsub.f32 1.5, %v658
    %v660 = vmul.f32 %v655, %v659
    %vm661 = vweird.f32 %v651
    %vm662 = vweird.f32 %v655
    %vm663 = vmor %vm661, %vm662
    %v664 = vsel %vm663, %v655, %v660
    %v665 = vrsqrt.pop %v652
    %v666 = vmul.f32 %v665, %v652
    %v667 = vmul.f32 %v666, %v665
    %v668 = vmul.f32 0.5, %v667
    %v669 = vsub.f32 1.5, %v668
    %v670 = vmul.f32 %v665, %v669
    %vm671 = vweird.f32 %v652
    %vm672 = vweird.f32 %v665
    %vm673 = vmor %vm671, %vm672
    %v674 = vsel %vm673, %v665, %v670
    %v675 = vrsqrt.pop %v653
    %v676 = vmul.f32 %v675, %v653
    %v677 = vmul.f32 %v676, %v675
    %v678 = vmul.f32 0.5, %v677
    %v679 = vsub.f32 1.5, %v678
    %v680 = vmul.f32 %v675, %v679
    %vm681 = vweird.f32 %v653
    %vm682 = vweird.f32 %v675
    %vm683 = vmor %vm681, %vm682
    %v684 = vsel %vm683, %v675, %v680
    %v685 = vrsqrt.pop %v654
    %v686 = vmul.f32 %v685, %v654
    %v687 = vmul.f32 %v686, %v685
    %v688 = vmul.f32 0.5, %v687
    %v689 = vsub.f32 1.5, %v688
    %v690 = vmul.f32 %v685, %v689
    %vm691 = vweird.f32 %v654
    %vm692 = vweird.f32 %v685
    %vm693 = vmor %vm691, %vm692
    %v694 = vsel %vm693, %v685, %v690
    %v695 = vmul.f32 %v627, %v664
    %v696 = vmul.f32 %v628, %v674
    %v697 = vmul.f32 %v629, %v684
    %v698 = vmul.f32 %v630, %v694
    %v699 = vperm.slane %v609, 0
    %v700 = vmul.f32 %v695, %v699
    %v701 = vmul.f32 %v696, %v699
    %v702 = vmul.f32 %v697, %v699
    %v703 = vmul.f32 %v698, %v699
    %v704 = vperm.slane %v610, 0
    %v705 = vadd.f32 %v700, %v704
    %v706 = vadd.f32 %v701, %v704
    %v707 = vadd.f32 %v702, %v704
    %v708 = vadd.f32 %v703, %v704
    %v709 = vpack.c.bf16 %v706, %v705
    %v710 = vpack.c.bf16 %v708, %v707
    %v711 = vld [vmem:[%s11] sm:$0xf]
    %v712 = vld [vmem:[%s11 + $0x4] sm:$0xf]
    %v713 = vld [vmem:[%s11 + $0x8] sm:$0xf]
    %v714 = vld [vmem:[%s11 + $0xc] sm:$0xf]
    %v715 = vld [vmem:[%s12] sm:$0x1]
    %v717 = vperm.slane %v715, 0
    %v723 = vunpack.c.l.b16 %v711
    %v724 = vunpack.c.l.b16 %v712
    %v725 = vunpack.c.l.b16 %v713
    %v726 = vunpack.c.l.b16 %v714
    %v727 = vpack.c.b16 %v724, %v723
    %v728 = vpack.c.b16 %v726, %v725
    %v732 = vsel %vm223, %v709, 0
    %v735 = vsel %vm223, %v710, 0
    %737 = vmatpush.bf16.msra.mxu0 0
    %738 = vmatpush.bf16.msra.mxu0 0
    %739 = vmatpush.bf16.msra.mxu0 0
    %740 = vmatpush.bf16.msra.mxu0 0
    %741 = vmatpush.bf16.msra.mxu0 0
    %742 = vmatpush.bf16.msra.mxu0 0
    %743 = vmatpush.bf16.msra.mxu0 %v728
    %744 = vmatpush.bf16.msra.mxu0 %v727
    %745 = vmatmul.bf16.gmra.mxu0 %v732
    %v746 = vpop.f32.mrf.mxu0
    %v747 = vadd.f32 %v717, %v746
    %v748 = vpop.f32.mrf.mxu0
    %v749 = vadd.f32 %v717, %v748
    %750 = vmatmul.bf16.gmra.mxu0 %v735
    %v751 = vpop.f32.mrf.mxu0
    %v752 = vadd.f32 %v717, %v751
    %v753 = vpop.f32.mrf.mxu0
    %v754 = vadd.f32 %v717, %v753
    %755 = vdwg.mxu0
    %v756 = vmul.f32 %v747, %v747
    %v757 = vmul.f32 %v749, %v749
    %v758 = vmul.f32 %v752, %v752
    %v759 = vmul.f32 %v754, %v754
    %v760 = vmul.f32 %v747, %v756
    %v761 = vmul.f32 %v749, %v757
    %v762 = vmul.f32 %v752, %v758
    %v763 = vmul.f32 %v754, %v759
    %v764 = vmul.f32 %v760, 0.044715
    %v765 = vmul.f32 %v761, 0.044715
    %v766 = vmul.f32 %v762, 0.044715
    %v767 = vmul.f32 %v763, 0.044715
    %v768 = vadd.f32 %v747, %v764
    %v769 = vadd.f32 %v749, %v765
    %v770 = vadd.f32 %v752, %v766
    %v771 = vadd.f32 %v754, %v767
    %v772 = vmul.f32 %v768, 0.7978846
    %v773 = vmul.f32 %v769, 0.7978846
    %v774 = vmul.f32 %v770, 0.7978846
    %v775 = vmul.f32 %v771, 0.7978846
    %v776 = vtanh.pop %v772
    %v777 = vtanh.pop %v773
    %v778 = vtanh.pop %v774
    %v779 = vtanh.pop %v775
    %v780 = vadd.f32 %v776, 1.0
    %v781 = vadd.f32 %v777, 1.0
    %v782 = vadd.f32 %v778, 1.0
    %v783 = vadd.f32 %v779, 1.0
    %v784 = vmul.f32 %v780, 0.5
    %v785 = vmul.f32 %v781, 0.5
    %v786 = vmul.f32 %v782, 0.5
    %v787 = vmul.f32 %v783, 0.5
    %v788 = vmul.f32 %v747, %v784
    %v789 = vmul.f32 %v749, %v785
    %v790 = vmul.f32 %v752, %v786
    %v791 = vmul.f32 %v754, %v787
    %v792 = vpack.c.bf16 %v789, %v788
    %v793 = vpack.c.bf16 %v791, %v790
    %v794 = vld [vmem:[%s13] sm:$0xf]
    %v795 = vld [vmem:[%s13 + $0x4] sm:$0xf]
    %v796 = vld [vmem:[%s13 + $0x8] sm:$0xf]
    %v797 = vld [vmem:[%s13 + $0xc] sm:$0xf]
    %v798 = vld [vmem:[%s13 + $0x10] sm:$0xf]
    %v799 = vld [vmem:[%s13 + $0x14] sm:$0xf]
    %v800 = vld [vmem:[%s13 + $0x18] sm:$0xf]
    %v801 = vld [vmem:[%s13 + $0x1c] sm:$0xf]
    %v802 = vld [vmem:[%s10 + $0x6] sm:$0x1]
    %v803 = vperm.slane %v802, 0
    %v812 = vunpack.c.l.b16 %v794
    %v813 = vunpack.c.l.b16 %v795
    %v814 = vunpack.c.l.b16 %v796
    %v815 = vunpack.c.l.b16 %v797
    %v816 = vunpack.c.l.b16 %v798
    %v817 = vunpack.c.l.b16 %v799
    %v818 = vunpack.c.l.b16 %v800
    %v819 = vunpack.c.l.b16 %v801
    %v820 = vpack.c.b16 %v813, %v812
    %v821 = vpack.c.b16 %v815, %v814
    %v822 = vpack.c.b16 %v817, %v816
    %v823 = vpack.c.b16 %v819, %v818
    %v829 = vsel %vm195, %v792, 0
    %v832 = vsel %vm195, %v793, 0
    %834 = vmatpush.bf16.msra.mxu0 0
    %835 = vmatpush.bf16.msra.mxu0 0
    %836 = vmatpush.bf16.msra.mxu0 0
    %837 = vmatpush.bf16.msra.mxu0 0
    %838 = vmatpush.bf16.msra.mxu0 %v823
    %839 = vmatpush.bf16.msra.mxu0 %v822
    %840 = vmatpush.bf16.msra.mxu0 %v821
    %841 = vmatpush.bf16.msra.mxu0 %v820
    %842 = vmatmul.bf16.gmra.mxu0 %v829
    %v843 = vpop.f32.mrf.mxu0
    %v844 = vadd.f32 %v803, %v843
    %v845 = vpop.f32.mrf.mxu0
    %v846 = vadd.f32 %v803, %v845
    %847 = vmatmul.bf16.gmra.mxu0 %v832
    %v848 = vpop.f32.mrf.mxu0
    %v849 = vadd.f32 %v803, %v848
    %v850 = vpop.f32.mrf.mxu0
    %v851 = vadd.f32 %v803, %v850
    %852 = vdwg.mxu0
    %v853 = vadd.f32 %v705, %v844
    %v854 = vadd.f32 %v706, %v846
    %v855 = vadd.f32 %v707, %v849
    %v856 = vadd.f32 %v708, %v851
    %v857 = vld [vmem:[%s10 + $0x7] sm:$0x1]
    %v858 = vld [vmem:[%s10 + $0x8] sm:$0x1]
    %v859 = vsel %vm223, %v853, 0.0
    %860 = vadd.xlane.f32.xlu0 %v859
    %v861 = vpop.xlane.xlu0 %860
    %v862 = vsel %vm223, %v854, 0.0
    %863 = vadd.xlane.f32.xlu0 %v862
    %v864 = vpop.xlane.xlu0 %863
    %v865 = vsel %vm223, %v855, 0.0
    %866 = vadd.xlane.f32.xlu0 %v865
    %v867 = vpop.xlane.xlu0 %866
    %v868 = vsel %vm223, %v856, 0.0
    %869 = vadd.xlane.f32.xlu0 %v868
    %v870 = vpop.xlane.xlu0 %869
    %v871 = vmul.f32 %v861, %v242
    %v872 = vmul.f32 %v864, %v242
    %v873 = vmul.f32 %v867, %v242
    %v874 = vmul.f32 %v870, %v242
    %v875 = vsub.f32 %v853, %v871
    %v876 = vsub.f32 %v854, %v872
    %v877 = vsub.f32 %v855, %v873
    %v878 = vsub.f32 %v856, %v874
    %v879 = vmul.f32 %v875, %v875
    %v880 = vmul.f32 %v876, %v876
    %v881 = vmul.f32 %v877, %v877
    %v882 = vmul.f32 %v878, %v878
    %v883 = vsel %vm223, %v879, 0.0
    %884 = vadd.xlane.f32.xlu0 %v883
    %v885 = vpop.xlane.xlu0 %884
    %v886 = vsel %vm223, %v880, 0.0
    %887 = vadd.xlane.f32.xlu0 %v886
    %v888 = vpop.xlane.xlu0 %887
    %v889 = vsel %vm223, %v881, 0.0
    %890 = vadd.xlane.f32.xlu0 %v889
    %v891 = vpop.xlane.xlu0 %890
    %v892 = vsel %vm223, %v882, 0.0
    %893 = vadd.xlane.f32.xlu0 %v892
    %v894 = vpop.xlane.xlu0 %893
    %v895 = vmul.f32 %v885, %v242
    %v896 = vmul.f32 %v888, %v242
    %v897 = vmul.f32 %v891, %v242
    %v898 = vmul.f32 %v894, %v242
    %v899 = vadd.f32 %v895, 1e-12
    %v900 = vadd.f32 %v896, 1e-12
    %v901 = vadd.f32 %v897, 1e-12
    %v902 = vadd.f32 %v898, 1e-12
    %v903 = vrsqrt.pop %v899
    %v904 = vmul.f32 %v903, %v899
    %v905 = vmul.f32 %v904, %v903
    %v906 = vmul.f32 0.5, %v905
    %v907 = vsub.f32 1.5, %v906
    %v908 = vmul.f32 %v903, %v907
    %vm909 = vweird.f32 %v899
    %vm910 = vweird.f32 %v903
    %vm911 = vmor %vm909, %vm910
    %v912 = vsel %vm911, %v903, %v908
    %v913 = vrsqrt.pop %v900
    %v914 = vmul.f32 %v913, %v900
    %v915 = vmul.f32 %v914, %v913
    %v916 = vmul.f32 0.5, %v915
    %v917 = vsub.f32 1.5, %v916
    %v918 = vmul.f32 %v913, %v917
    %vm919 = vweird.f32 %v900
    %vm920 = vweird.f32 %v913
    %vm921 = vmor %vm919, %vm920
    %v922 = vsel %vm921, %v913, %v918
    %v923 = vrsqrt.pop %v901
    %v924 = vmul.f32 %v923, %v901
    %v925 = vmul.f32 %v924, %v923
    %v926 = vmul.f32 0.5, %v925
    %v927 = vsub.f32 1.5, %v926
    %v928 = vmul.f32 %v923, %v927
    %vm929 = vweird.f32 %v901
    %vm930 = vweird.f32 %v923
    %vm931 = vmor %vm929, %vm930
    %v932 = vsel %vm931, %v923, %v928
    %v933 = vrsqrt.pop %v902
    %v934 = vmul.f32 %v933, %v902
    %v935 = vmul.f32 %v934, %v933
    %v936 = vmul.f32 0.5, %v935
    %v937 = vsub.f32 1.5, %v936
    %v938 = vmul.f32 %v933, %v937
    %vm939 = vweird.f32 %v902
    %vm940 = vweird.f32 %v933
    %vm941 = vmor %vm939, %vm940
    %v942 = vsel %vm941, %v933, %v938
    %v943 = vmul.f32 %v875, %v912
    %v944 = vmul.f32 %v876, %v922
    %v945 = vmul.f32 %v877, %v932
    %v946 = vmul.f32 %v878, %v942
    %v947 = vperm.slane %v857, 0
    %v948 = vmul.f32 %v943, %v947
    %v949 = vmul.f32 %v944, %v947
    %v950 = vmul.f32 %v945, %v947
    %v951 = vmul.f32 %v946, %v947
    %v952 = vperm.slane %v858, 0
    %v953 = vadd.f32 %v948, %v952
    %v954 = vadd.f32 %v949, %v952
    %v955 = vadd.f32 %v950, %v952
    %v956 = vadd.f32 %v951, %v952
    %v957 = vpack.c.bf16 %v954, %v953
    %v958 = vpack.c.bf16 %v956, %v955
    %s959 = scalar_lea.vmem [#allocation5], 16
    %v960 = vld [vmem:[%s959] sm:$0xf]
    %v961 = vld [vmem:[%s959 + $0x4] sm:$0xf]
    %v962 = vld [vmem:[%s959 + $0x8] sm:$0xf]
    %v963 = vld [vmem:[%s959 + $0xc] sm:$0xf]
    %s964 = scalar_lea.vmem %s10, 16
    %v965 = vld [vmem:[%s964] sm:$0x1]
    %v966 = vperm.slane %v965, 0
    %v971 = vunpack.c.l.b16 %v960
    %v972 = vunpack.c.l.b16 %v961
    %v973 = vunpack.c.l.b16 %v962
    %v974 = vunpack.c.l.b16 %v963
    %v975 = vpack.c.b16 %v972, %v971
    %v976 = vpack.c.b16 %v974, %v973
    %v980 = vsel %vm223, %v957, 0
    %v983 = vsel %vm223, %v958, 0
    %985 = vmatpush.bf16.msra.mxu0 0
    %986 = vmatpush.bf16.msra.mxu0 0
    %987 = vmatpush.bf16.msra.mxu0 0
    %988 = vmatpush.bf16.msra.mxu0 0
    %989 = vmatpush.bf16.msra.mxu0 0
    %990 = vmatpush.bf16.msra.mxu0 0
    %991 = vmatpush.bf16.msra.mxu0 %v976
    %992 = vmatpush.bf16.msra.mxu0 %v975
    %993 = vmatmul.bf16.gmra.mxu0 %v980
    %v994 = vpop.f32.mrf.mxu0
    %v995 = vadd.f32 %v966, %v994
    %v996 = vpop.f32.mrf.mxu0
    %v997 = vadd.f32 %v966, %v996
    %998 = vmatmul.bf16.gmra.mxu0 %v983
    %v999 = vpop.f32.mrf.mxu0
    %v1000 = vadd.f32 %v966, %v999
    %v1001 = vpop.f32.mrf.mxu0
    %v1002 = vadd.f32 %v966, %v1001
    %1003 = vdwg.mxu0
    %s1004 = scalar_lea.vmem [#allocation7], 16
    %v1005 = vld [vmem:[%s1004] sm:$0xf]
    %v1006 = vld [vmem:[%s1004 + $0x4] sm:$0xf]
    %v1007 = vld [vmem:[%s1004 + $0x8] sm:$0xf]
    %v1008 = vld [vmem:[%s1004 + $0xc] sm:$0xf]
    %v1009 = vld [vmem:[%s964 + $0x1] sm:$0x1]
    %v1010 = vperm.slane %v1009, 0
    %v1015 = vunpack.c.l.b16 %v1005
    %v1016 = vunpack.c.l.b16 %v1006
    %v1017 = vunpack.c.l.b16 %v1007
    %v1018 = vunpack.c.l.b16 %v1008
    %v1019 = vpack.c.b16 %v1016, %v1015
    %v1020 = vpack.c.b16 %v1018, %v1017
    %1023 = vmatpush.bf16.msra.mxu0 0
    %1024 = vmatpush.bf16.msra.mxu0 0
    %1025 = vmatpush.bf16.msra.mxu0 0
    %1026 = vmatpush.bf16.msra.mxu0 0
    %1027 = vmatpush.bf16.msra.mxu0 0
    %1028 = vmatpush.bf16.msra.mxu0 0
    %1029 = vmatpush.bf16.msra.mxu0 %v1020
    %1030 = vmatpush.bf16.msra.mxu0 %v1019
    %1031 = vmatmul.bf16.gmra.mxu0 %v980
    %v1032 = vpop.f32.mrf.mxu0
    %v1033 = vadd.f32 %v1010, %v1032
    %v1034 = vpop.f32.mrf.mxu0
    %v1035 = vadd.f32 %v1010, %v1034
    %1036 = vmatmul.bf16.gmra.mxu0 %v983
    %v1037 = vpop.f32.mrf.mxu0
    %v1038 = vadd.f32 %v1010, %v1037
    %v1039 = vpop.f32.mrf.mxu0
    %v1040 = vadd.f32 %v1010, %v1039
    %1041 = vdwg.mxu0
    %s1042 = scalar_lea.vmem [#allocation8], 16
    %v1043 = vld [vmem:[%s1042] sm:$0xf]
    %v1044 = vld [vmem:[%s1042 + $0x4] sm:$0xf]
    %v1045 = vld [vmem:[%s1042 + $0x8] sm:$0xf]
    %v1046 = vld [vmem:[%s1042 + $0xc] sm:$0xf]
    %v1047 = vld [vmem:[%s964 + $0x2] sm:$0x1]
    %v1048 = vperm.slane %v1047, 0
    %v1053 = vunpack.c.l.b16 %v1043
    %v1054 = vunpack.c.l.b16 %v1044
    %v1055 = vunpack.c.l.b16 %v1045
    %v1056 = vunpack.c.l.b16 %v1046
    %v1057 = vpack.c.b16 %v1054, %v1053
    %v1058 = vpack.c.b16 %v1056, %v1055
    %1061 = vmatpush.bf16.msra.mxu0 0
    %1062 = vmatpush.bf16.msra.mxu0 0
    %1063 = vmatpush.bf16.msra.mxu0 0
    %1064 = vmatpush.bf16.msra.mxu0 0
    %1065 = vmatpush.bf16.msra.mxu0 0
    %1066 = vmatpush.bf16.msra.mxu0 0
    %1067 = vmatpush.bf16.msra.mxu0 %v1058
    %1068 = vmatpush.bf16.msra.mxu0 %v1057
    %1069 = vmatmul.bf16.gmra.mxu0 %v980
    %v1070 = vpop.f32.mrf.mxu0
    %v1071 = vadd.f32 %v1048, %v1070
    %v1072 = vpop.f32.mrf.mxu0
    %v1073 = vadd.f32 %v1048, %v1072
    %1074 = vmatmul.bf16.gmra.mxu0 %v983
    %v1075 = vpop.f32.mrf.mxu0
    %v1076 = vadd.f32 %v1048, %v1075
    %v1077 = vpop.f32.mrf.mxu0
    %v1078 = vadd.f32 %v1048, %v1077
    %1079 = vdwg.mxu0
    %v1080 = vpack.c.bf16 %v997, %v995
    %v1081 = vpack.c.bf16 %v1002, %v1000
    %v1082 = vpack.c.bf16 %v1035, %v1033
    %v1083 = vpack.c.bf16 %v1040, %v1038
    %v1085 = vsel %vm223, %v1080, 0
    %v1088 = vsel %vm223, %v1081, 0
    %v1091 = vsel %vm223, %v1082, 0
    %v1094 = vsel %vm223, %v1083, 0
    %1096 = vmatpush.bf16.xpose.msra.mxu0 0
    %1097 = vmatpush.bf16.xpose.msra.mxu0 0
    %1098 = vmatpush.bf16.xpose.msra.mxu0 0
    %1099 = vmatpush.bf16.xpose.msra.mxu0 0
    %1100 = vmatpush.bf16.xpose.msra.mxu0 0
    %1101 = vmatpush.bf16.xpose.msra.mxu0 0
    %1102 = vmatpush.bf16.xpose.msra.mxu0 %v1094
    %1103 = vmatpush.bf16.xpose.msra.mxu0 %v1091
    %1104 = vmatmul.bf16.gmra.mxu0 %v1085
    %v1105 = vpop.f32.mrf.mxu0
    %v1106 = vadd.f32 %v329, %v1105
    %v1107 = vpop.f32.mrf.mxu0
    %v1108 = vadd.f32 %v330, %v1107
    %1109 = vmatmul.bf16.gmra.mxu0 %v1088
    %v1110 = vpop.f32.mrf.mxu0
    %v1111 = vadd.f32 %v331, %v1110
    %v1112 = vpop.f32.mrf.mxu0
    %v1113 = vadd.f32 %v332, %v1112
    %1114 = vdwg.mxu0
    %v1115 = vsel %vm223, %v1106, -inf
    %1116 = vmax.xlane.f32.xlu0 %v1115
    %v1117 = vpop.xlane.xlu0 %1116
    %v1118 = vsel %vm223, %v1108, -inf
    %1119 = vmax.xlane.f32.xlu0 %v1118
    %v1120 = vpop.xlane.xlu0 %1119
    %v1121 = vsel %vm223, %v1111, -inf
    %1122 = vmax.xlane.f32.xlu0 %v1121
    %v1123 = vpop.xlane.xlu0 %1122
    %v1124 = vsel %vm223, %v1113, -inf
    %1125 = vmax.xlane.f32.xlu0 %v1124
    %v1126 = vpop.xlane.xlu0 %1125
    %v1127 = vsub.f32 %v1106, %v1117
    %v1128 = vsub.f32 %v1108, %v1120
    %v1129 = vsub.f32 %v1111, %v1123
    %v1130 = vsub.f32 %v1113, %v1126
    %v1131 = vmul.f32 %v1127, 1.442695
    %v1132 = vpow.pop %v1131
    %v1133 = vmul.f32 %v1128, 1.442695
    %v1134 = vpow.pop %v1133
    %v1135 = vmul.f32 %v1129, 1.442695
    %v1136 = vpow.pop %v1135
    %v1137 = vmul.f32 %v1130, 1.442695
    %v1138 = vpow.pop %v1137
    %v1139 = vsel %vm223, %v1132, 0.0
    %1140 = vadd.xlane.f32.xlu0 %v1139
    %v1141 = vpop.xlane.xlu0 %1140
    %v1142 = vsel %vm223, %v1134, 0.0
    %1143 = vadd.xlane.f32.xlu0 %v1142
    %v1144 = vpop.xlane.xlu0 %1143
    %v1145 = vsel %vm223, %v1136, 0.0
    %1146 = vadd.xlane.f32.xlu0 %v1145
    %v1147 = vpop.xlane.xlu0 %1146
    %v1148 = vsel %vm223, %v1138, 0.0
    %1149 = vadd.xlane.f32.xlu0 %v1148
    %v1150 = vpop.xlane.xlu0 %1149
    %v1151 = vrcp.pop %v1141
    %v1152 = vrcp.pop %v1144
    %v1153 = vrcp.pop %v1147
    %v1154 = vrcp.pop %v1150
    %v1155 = vmul.f32 %v1132, %v1151
    %v1156 = vmul.f32 %v1134, %v1152
    %v1157 = vmul.f32 %v1136, %v1153
    %v1158 = vmul.f32 %v1138, %v1154
    %v1159 = vpack.c.bf16 %v1156, %v1155
    %v1160 = vpack.c.bf16 %v1158, %v1157
    %v1161 = vpack.c.bf16 %v1073, %v1071
    %v1162 = vpack.c.bf16 %v1078, %v1076
    %v1164 = vsel %vm223, %v1159, 0
    %v1167 = vsel %vm223, %v1160, 0
    %1169 = vmatpush.bf16.msra.mxu0 0
    %1170 = vmatpush.bf16.msra.mxu0 0
    %1171 = vmatpush.bf16.msra.mxu0 0
    %1172 = vmatpush.bf16.msra.mxu0 0
    %1173 = vmatpush.bf16.msra.mxu0 0
    %1174 = vmatpush.bf16.msra.mxu0 0
    %1175 = vmatpush.bf16.msra.mxu0 %v1162
    %1176 = vmatpush.bf16.msra.mxu0 %v1161
    %1177 = vmatmul.bf16.gmra.mxu0 %v1164
    %v1178 = vpop.f32.mrf.mxu0
    %v1179 = vadd.f32 0.0, %v1178
    %v1180 = vpop.f32.mrf.mxu0
    %v1181 = vadd.f32 0.0, %v1180
    %1182 = vmatmul.bf16.gmra.mxu0 %v1167
    %v1183 = vpop.f32.mrf.mxu0
    %v1184 = vadd.f32 0.0, %v1183
    %v1185 = vpop.f32.mrf.mxu0
    %v1186 = vadd.f32 0.0, %v1185
    %1187 = vdwg.mxu0
    %v1188 = vpack.c.bf16 %v1181, %v1179
    %v1189 = vpack.c.bf16 %v1186, %v1184
    %s1190 = scalar_lea.vmem [#allocation10], 16
    %v1191 = vld [vmem:[%s1190] sm:$0xf]
    %v1192 = vld [vmem:[%s1190 + $0x4] sm:$0xf]
    %v1193 = vld [vmem:[%s1190 + $0x8] sm:$0xf]
    %v1194 = vld [vmem:[%s1190 + $0xc] sm:$0xf]
    %v1195 = vld [vmem:[%s964 + $0x3] sm:$0x1]
    %v1196 = vperm.slane %v1195, 0
    %v1201 = vunpack.c.l.b16 %v1191
    %v1202 = vunpack.c.l.b16 %v1192
    %v1203 = vunpack.c.l.b16 %v1193
    %v1204 = vunpack.c.l.b16 %v1194
    %v1205 = vpack.c.b16 %v1202, %v1201
    %v1206 = vpack.c.b16 %v1204, %v1203
    %v1210 = vsel %vm223, %v1188, 0
    %v1213 = vsel %vm223, %v1189, 0
    %1215 = vmatpush.bf16.msra.mxu0 0
    %1216 = vmatpush.bf16.msra.mxu0 0
    %1217 = vmatpush.bf16.msra.mxu0 0
    %1218 = vmatpush.bf16.msra.mxu0 0
    %1219 = vmatpush.bf16.msra.mxu0 0
    %1220 = vmatpush.bf16.msra.mxu0 0
    %1221 = vmatpush.bf16.msra.mxu0 %v1206
    %1222 = vmatpush.bf16.msra.mxu0 %v1205
    %1223 = vmatmul.bf16.gmra.mxu0 %v1210
    %v1224 = vpop.f32.mrf.mxu0
    %v1225 = vadd.f32 %v1196, %v1224
    %v1226 = vpop.f32.mrf.mxu0
    %v1227 = vadd.f32 %v1196, %v1226
    %1228 = vmatmul.bf16.gmra.mxu0 %v1213
    %v1229 = vpop.f32.mrf.mxu0
    %v1230 = vadd.f32 %v1196, %v1229
    %v1231 = vpop.f32.mrf.mxu0
    %v1232 = vadd.f32 %v1196, %v1231
    %1233 = vdwg.mxu0
    %v1234 = vadd.f32 %v953, %v1225
    %v1235 = vadd.f32 %v954, %v1227
    %v1236 = vadd.f32 %v955, %v1230
    %v1237 = vadd.f32 %v956, %v1232
    %v1238 = vld [vmem:[%s964 + $0x4] sm:$0x1]
    %v1239 = vld [vmem:[%s964 + $0x5] sm:$0x1]
    %v1240 = vsel %vm223, %v1234, 0.0
    %1241 = vadd.xlane.f32.xlu0 %v1240
    %v1242 = vpop.xlane.xlu0 %1241
    %v1243 = vsel %vm223, %v1235, 0.0
    %1244 = vadd.xlane.f32.xlu0 %v1243
    %v1245 = vpop.xlane.xlu0 %1244
    %v1246 = vsel %vm223, %v1236, 0.0
    %1247 = vadd.xlane.f32.xlu0 %v1246
    %v1248 = vpop.xlane.xlu0 %1247
    %v1249 = vsel %vm223, %v1237, 0.0
    %1250 = vadd.xlane.f32.xlu0 %v1249
    %v1251 = vpop.xlane.xlu0 %1250
    %v1252 = vmul.f32 %v1242, %v242
    %v1253 = vmul.f32 %v1245, %v242
    %v1254 = vmul.f32 %v1248, %v242
    %v1255 = vmul.f32 %v1251, %v242
    %v1256 = vsub.f32 %v1234, %v1252
    %v1257 = vsub.f32 %v1235, %v1253
    %v1258 = vsub.f32 %v1236, %v1254
    %v1259 = vsub.f32 %v1237, %v1255
    %v1260 = vmul.f32 %v1256, %v1256
    %v1261 = vmul.f32 %v1257, %v1257
    %v1262 = vmul.f32 %v1258, %v1258
    %v1263 = vmul.f32 %v1259, %v1259
    %v1264 = vsel %vm223, %v1260, 0.0
    %1265 = vadd.xlane.f32.xlu0 %v1264
    %v1266 = vpop.xlane.xlu0 %1265
    %v1267 = vsel %vm223, %v1261, 0.0
    %1268 = vadd.xlane.f32.xlu0 %v1267
    %v1269 = vpop.xlane.xlu0 %1268
    %v1270 = vsel %vm223, %v1262, 0.0
    %1271 = vadd.xlane.f32.xlu0 %v1270
    %v1272 = vpop.xlane.xlu0 %1271
    %v1273 = vsel %vm223, %v1263, 0.0
    %1274 = vadd.xlane.f32.xlu0 %v1273
    %v1275 = vpop.xlane.xlu0 %1274
    %v1276 = vmul.f32 %v1266, %v242
    %v1277 = vmul.f32 %v1269, %v242
    %v1278 = vmul.f32 %v1272, %v242
    %v1279 = vmul.f32 %v1275, %v242
    %v1280 = vadd.f32 %v1276, 1e-12
    %v1281 = vadd.f32 %v1277, 1e-12
    %v1282 = vadd.f32 %v1278, 1e-12
    %v1283 = vadd.f32 %v1279, 1e-12
    %v1284 = vrsqrt.pop %v1280
    %v1285 = vmul.f32 %v1284, %v1280
    %v1286 = vmul.f32 %v1285, %v1284
    %v1287 = vmul.f32 0.5, %v1286
    %v1288 = vsub.f32 1.5, %v1287
    %v1289 = vmul.f32 %v1284, %v1288
    %vm1290 = vweird.f32 %v1280
    %vm1291 = vweird.f32 %v1284
    %vm1292 = vmor %vm1290, %vm1291
    %v1293 = vsel %vm1292, %v1284, %v1289
    %v1294 = vrsqrt.pop %v1281
    %v1295 = vmul.f32 %v1294, %v1281
    %v1296 = vmul.f32 %v1295, %v1294
    %v1297 = vmul.f32 0.5, %v1296
    %v1298 = vsub.f32 1.5, %v1297
    %v1299 = vmul.f32 %v1294, %v1298
    %vm1300 = vweird.f32 %v1281
    %vm1301 = vweird.f32 %v1294
    %vm1302 = vmor %vm1300, %vm1301
    %v1303 = vsel %vm1302, %v1294, %v1299
    %v1304 = vrsqrt.pop %v1282
    %v1305 = vmul.f32 %v1304, %v1282
    %v1306 = vmul.f32 %v1305, %v1304
    %v1307 = vmul.f32 0.5, %v1306
    %v1308 = vsub.f32 1.5, %v1307
    %v1309 = vmul.f32 %v1304, %v1308
    %vm1310 = vweird.f32 %v1282
    %vm1311 = vweird.f32 %v1304
    %vm1312 = vmor %vm1310, %vm1311
    %v1313 = vsel %vm1312, %v1304, %v1309
    %v1314 = vrsqrt.pop %v1283
    %v1315 = vmul.f32 %v1314, %v1283
    %v1316 = vmul.f32 %v1315, %v1314
    %v1317 = vmul.f32 0.5, %v1316
    %v1318 = vsub.f32 1.5, %v1317
    %v1319 = vmul.f32 %v1314, %v1318
    %vm1320 = vweird.f32 %v1283
    %vm1321 = vweird.f32 %v1314
    %vm1322 = vmor %vm1320, %vm1321
    %v1323 = vsel %vm1322, %v1314, %v1319
    %v1324 = vmul.f32 %v1256, %v1293
    %v1325 = vmul.f32 %v1257, %v1303
    %v1326 = vmul.f32 %v1258, %v1313
    %v1327 = vmul.f32 %v1259, %v1323
    %v1328 = vperm.slane %v1238, 0
    %v1329 = vmul.f32 %v1324, %v1328
    %v1330 = vmul.f32 %v1325, %v1328
    %v1331 = vmul.f32 %v1326, %v1328
    %v1332 = vmul.f32 %v1327, %v1328
    %v1333 = vperm.slane %v1239, 0
    %v1334 = vadd.f32 %v1329, %v1333
    %v1335 = vadd.f32 %v1330, %v1333
    %v1336 = vadd.f32 %v1331, %v1333
    %v1337 = vadd.f32 %v1332, %v1333
    %v1338 = vpack.c.bf16 %v1335, %v1334
    %v1339 = vpack.c.bf16 %v1337, %v1336
    %s1340 = scalar_lea.vmem %s11, 16
    %v1341 = vld [vmem:[%s1340] sm:$0xf]
    %v1342 = vld [vmem:[%s1340 + $0x4] sm:$0xf]
    %v1343 = vld [vmem:[%s1340 + $0x8] sm:$0xf]
    %v1344 = vld [vmem:[%s1340 + $0xc] sm:$0xf]
    %s1345 = scalar_lea.vmem %s12, 1
    %v1346 = vld [vmem:[%s1345] sm:$0x1]
    %v1348 = vperm.slane %v1346, 0
    %v1354 = vunpack.c.l.b16 %v1341
    %v1355 = vunpack.c.l.b16 %v1342
    %v1356 = vunpack.c.l.b16 %v1343
    %v1357 = vunpack.c.l.b16 %v1344
    %v1358 = vpack.c.b16 %v1355, %v1354
    %v1359 = vpack.c.b16 %v1357, %v1356
    %v1363 = vsel %vm223, %v1338, 0
    %v1366 = vsel %vm223, %v1339, 0
    %1368 = vmatpush.bf16.msra.mxu0 0
    %1369 = vmatpush.bf16.msra.mxu0 0
    %1370 = vmatpush.bf16.msra.mxu0 0
    %1371 = vmatpush.bf16.msra.mxu0 0
    %1372 = vmatpush.bf16.msra.mxu0 0
    %1373 = vmatpush.bf16.msra.mxu0 0
    %1374 = vmatpush.bf16.msra.mxu0 %v1359
    %1375 = vmatpush.bf16.msra.mxu0 %v1358
    %1376 = vmatmul.bf16.gmra.mxu0 %v1363
    %v1377 = vpop.f32.mrf.mxu0
    %v1378 = vadd.f32 %v1348, %v1377
    %v1379 = vpop.f32.mrf.mxu0
    %v1380 = vadd.f32 %v1348, %v1379
    %1381 = vmatmul.bf16.gmra.mxu0 %v1366
    %v1382 = vpop.f32.mrf.mxu0
    %v1383 = vadd.f32 %v1348, %v1382
    %v1384 = vpop.f32.mrf.mxu0
    %v1385 = vadd.f32 %v1348, %v1384
    %1386 = vdwg.mxu0
    %v1387 = vmul.f32 %v1378, %v1378
    %v1388 = vmul.f32 %v1380, %v1380
    %v1389 = vmul.f32 %v1383, %v1383
    %v1390 = vmul.f32 %v1385, %v1385
    %v1391 = vmul.f32 %v1378, %v1387
    %v1392 = vmul.f32 %v1380, %v1388
    %v1393 = vmul.f32 %v1383, %v1389
    %v1394 = vmul.f32 %v1385, %v1390
    %v1395 = vmul.f32 %v1391, 0.044715
    %v1396 = vmul.f32 %v1392, 0.044715
    %v1397 = vmul.f32 %v1393, 0.044715
    %v1398 = vmul.f32 %v1394, 0.044715
    %v1399 = vadd.f32 %v1378, %v1395
    %v1400 = vadd.f32 %v1380, %v1396
    %v1401 = vadd.f32 %v1383, %v1397
    %v1402 = vadd.f32 %v1385, %v1398
    %v1403 = vmul.f32 %v1399, 0.7978846
    %v1404 = vmul.f32 %v1400, 0.7978846
    %v1405 = vmul.f32 %v1401, 0.7978846
    %v1406 = vmul.f32 %v1402, 0.7978846
    %v1407 = vtanh.pop %v1403
    %v1408 = vtanh.pop %v1404
    %v1409 = vtanh.pop %v1405
    %v1410 = vtanh.pop %v1406
    %v1411 = vadd.f32 %v1407, 1.0
    %v1412 = vadd.f32 %v1408, 1.0
    %v1413 = vadd.f32 %v1409, 1.0
    %v1414 = vadd.f32 %v1410, 1.0
    %v1415 = vmul.f32 %v1411, 0.5
    %v1416 = vmul.f32 %v1412, 0.5
    %v1417 = vmul.f32 %v1413, 0.5
    %v1418 = vmul.f32 %v1414, 0.5
    %v1419 = vmul.f32 %v1378, %v1415
    %v1420 = vmul.f32 %v1380, %v1416
    %v1421 = vmul.f32 %v1383, %v1417
    %v1422 = vmul.f32 %v1385, %v1418
    %v1423 = vpack.c.bf16 %v1420, %v1419
    %v1424 = vpack.c.bf16 %v1422, %v1421
    %s1425 = scalar_lea.vmem %s13, 32
    %v1426 = vld [vmem:[%s1425] sm:$0xf]
    %v1427 = vld [vmem:[%s1425 + $0x4] sm:$0xf]
    %v1428 = vld [vmem:[%s1425 + $0x8] sm:$0xf]
    %v1429 = vld [vmem:[%s1425 + $0xc] sm:$0xf]
    %v1430 = vld [vmem:[%s1425 + $0x10] sm:$0xf]
    %v1431 = vld [vmem:[%s1425 + $0x14] sm:$0xf]
    %v1432 = vld [vmem:[%s1425 + $0x18] sm:$0xf]
    %v1433 = vld [vmem:[%s1425 + $0x1c] sm:$0xf]
    %v1434 = vld [vmem:[%s964 + $0x6] sm:$0x1]
    %v1435 = vperm.slane %v1434, 0
    %v1444 = vunpack.c.l.b16 %v1426
    %v1445 = vunpack.c.l.b16 %v1427
    %v1446 = vunpack.c.l.b16 %v1428
    %v1447 = vunpack.c.l.b16 %v1429
    %v1448 = vunpack.c.l.b16 %v1430
    %v1449 = vunpack.c.l.b16 %v1431
    %v1450 = vunpack.c.l.b16 %v1432
    %v1451 = vunpack.c.l.b16 %v1433
    %v1452 = vpack.c.b16 %v1445, %v1444
    %v1453 = vpack.c.b16 %v1447, %v1446
    %v1454 = vpack.c.b16 %v1449, %v1448
    %v1455 = vpack.c.b16 %v1451, %v1450
    %v1461 = vsel %vm195, %v1423, 0
    %v1464 = vsel %vm195, %v1424, 0
    %1466 = vmatpush.bf16.msra.mxu0 0
    %1467 = vmatpush.bf16.msra.mxu0 0
    %1468 = vmatpush.bf16.msra.mxu0 0
    %1469 = vmatpush.bf16.msra.mxu0 0
    %1470 = vmatpush.bf16.msra.mxu0 %v1455
    %1471 = vmatpush.bf16.msra.mxu0 %v1454
    %1472 = vmatpush.bf16.msra.mxu0 %v1453
    %1473 = vmatpush.bf16.msra.mxu0 %v1452
    %1474 = vmatmul.bf16.gmra.mxu0 %v1461
    %v1475 = vpop.f32.mrf.mxu0
    %v1476 = vadd.f32 %v1435, %v1475
    %v1477 = vpop.f32.mrf.mxu0
    %v1478 = vadd.f32 %v1435, %v1477
    %1479 = vmatmul.bf16.gmra.mxu0 %v1464
    %v1480 = vpop.f32.mrf.mxu0
    %v1481 = vadd.f32 %v1435, %v1480
    %v1482 = vpop.f32.mrf.mxu0
    %v1483 = vadd.f32 %v1435, %v1482
    %1484 = vdwg.mxu0
    %v1485 = vadd.f32 %v1334, %v1476
    %v1486 = vadd.f32 %v1335, %v1478
    %v1487 = vadd.f32 %v1336, %v1481
    %v1488 = vadd.f32 %v1337, %v1483
    %v1489 = vld [vmem:[%s964 + $0x7] sm:$0x1]
    %v1490 = vld [vmem:[%s964 + $0x8] sm:$0x1]
    %v1491 = vsel %vm223, %v1485, 0.0
    %1492 = vadd.xlane.f32.xlu0 %v1491
    %v1493 = vpop.xlane.xlu0 %1492
    %v1494 = vsel %vm223, %v1486, 0.0
    %1495 = vadd.xlane.f32.xlu0 %v1494
    %v1496 = vpop.xlane.xlu0 %1495
    %v1497 = vsel %vm223, %v1487, 0.0
    %1498 = vadd.xlane.f32.xlu0 %v1497
    %v1499 = vpop.xlane.xlu0 %1498
    %v1500 = vsel %vm223, %v1488, 0.0
    %1501 = vadd.xlane.f32.xlu0 %v1500
    %v1502 = vpop.xlane.xlu0 %1501
    %v1503 = vmul.f32 %v1493, %v242
    %v1504 = vmul.f32 %v1496, %v242
    %v1505 = vmul.f32 %v1499, %v242
    %v1506 = vmul.f32 %v1502, %v242
    %v1507 = vsub.f32 %v1485, %v1503
    %v1508 = vsub.f32 %v1486, %v1504
    %v1509 = vsub.f32 %v1487, %v1505
    %v1510 = vsub.f32 %v1488, %v1506
    %v1511 = vmul.f32 %v1507, %v1507
    %v1512 = vmul.f32 %v1508, %v1508
    %v1513 = vmul.f32 %v1509, %v1509
    %v1514 = vmul.f32 %v1510, %v1510
    %v1515 = vsel %vm223, %v1511, 0.0
    %1516 = vadd.xlane.f32.xlu0 %v1515
    %v1517 = vpop.xlane.xlu0 %1516
    %v1518 = vsel %vm223, %v1512, 0.0
    %1519 = vadd.xlane.f32.xlu0 %v1518
    %v1520 = vpop.xlane.xlu0 %1519
    %v1521 = vsel %vm223, %v1513, 0.0
    %1522 = vadd.xlane.f32.xlu0 %v1521
    %v1523 = vpop.xlane.xlu0 %1522
    %v1524 = vsel %vm223, %v1514, 0.0
    %1525 = vadd.xlane.f32.xlu0 %v1524
    %v1526 = vpop.xlane.xlu0 %1525
    %v1527 = vmul.f32 %v1517, %v242
    %v1528 = vmul.f32 %v1520, %v242
    %v1529 = vmul.f32 %v1523, %v242
    %v1530 = vmul.f32 %v1526, %v242
    %v1531 = vadd.f32 %v1527, 1e-12
    %v1532 = vadd.f32 %v1528, 1e-12
    %v1533 = vadd.f32 %v1529, 1e-12
    %v1534 = vadd.f32 %v1530, 1e-12
    %v1535 = vrsqrt.pop %v1531
    %v1536 = vmul.f32 %v1535, %v1531
    %v1537 = vmul.f32 %v1536, %v1535
    %v1538 = vmul.f32 0.5, %v1537
    %v1539 = vsub.f32 1.5, %v1538
    %v1540 = vmul.f32 %v1535, %v1539
    %vm1541 = vweird.f32 %v1531
    %vm1542 = vweird.f32 %v1535
    %vm1543 = vmor %vm1541, %vm1542
    %v1544 = vsel %vm1543, %v1535, %v1540
    %v1545 = vrsqrt.pop %v1532
    %v1546 = vmul.f32 %v1545, %v1532
    %v1547 = vmul.f32 %v1546, %v1545
    %v1548 = vmul.f32 0.5, %v1547
    %v1549 = vsub.f32 1.5, %v1548
    %v1550 = vmul.f32 %v1545, %v1549
    %vm1551 = vweird.f32 %v1532
    %vm1552 = vweird.f32 %v1545
    %vm1553 = vmor %vm1551, %vm1552
    %v1554 = vsel %vm1553, %v1545, %v1550
    %v1555 = vrsqrt.pop %v1533
    %v1556 = vmul.f32 %v1555, %v1533
    %v1557 = vmul.f32 %v1556, %v1555
    %v1558 = vmul.f32 0.5, %v1557
    %v1559 = vsub.f32 1.5, %v1558
    %v1560 = vmul.f32 %v1555, %v1559
    %vm1561 = vweird.f32 %v1533
    %vm1562 = vweird.f32 %v1555
    %vm1563 = vmor %vm1561, %vm1562
    %v1564 = vsel %vm1563, %v1555, %v1560
    %v1565 = vrsqrt.pop %v1534
    %v1566 = vmul.f32 %v1565, %v1534
    %v1567 = vmul.f32 %v1566, %v1565
    %v1568 = vmul.f32 0.5, %v1567
    %v1569 = vsub.f32 1.5, %v1568
    %v1570 = vmul.f32 %v1565, %v1569
    %vm1571 = vweird.f32 %v1534
    %vm1572 = vweird.f32 %v1565
    %vm1573 = vmor %vm1571, %vm1572
    %v1574 = vsel %vm1573, %v1565, %v1570
    %v1575 = vmul.f32 %v1507, %v1544
    %v1576 = vmul.f32 %v1508, %v1554
    %v1577 = vmul.f32 %v1509, %v1564
    %v1578 = vmul.f32 %v1510, %v1574
    %v1579 = vperm.slane %v1489, 0
    %v1580 = vmul.f32 %v1575, %v1579
    %v1581 = vmul.f32 %v1576, %v1579
    %v1582 = vmul.f32 %v1577, %v1579
    %v1583 = vmul.f32 %v1578, %v1579
    %v1584 = vperm.slane %v1490, 0
    %v1585 = vadd.f32 %v1580, %v1584
    %v1586 = vadd.f32 %v1581, %v1584
    %v1587 = vadd.f32 %v1582, %v1584
    %v1588 = vadd.f32 %v1583, %v1584
    %v1589 = vld [vmem:[%s5] sm:$0xff]
    %v1591 = vsel %vm223, %v1589, 0
    %1593 = vmatpush.msra.mxu0 0.0
    %1594 = vmatpush.msra.mxu0 0.0
    %1595 = vmatpush.msra.mxu0 0.0
    %1596 = vmatpush.msra.mxu0 0.0
    %1597 = vmatpush.msra.mxu0 0.0
    %1598 = vmatpush.msra.mxu0 0.0
    %1599 = vmatpush.msra.mxu0 0.0
    %1600 = vmatpush.msra.mxu0 0.0
    %1601 = vmatpush.msra.mxu0 0.0
    %1602 = vmatpush.msra.mxu0 0.0
    %1603 = vmatpush.msra.mxu0 0.0
    %1604 = vmatpush.msra.mxu0 0.0
    %1605 = vmatpush.msra.mxu0 %v1588
    %1606 = vmatpush.msra.mxu0 %v1587
    %1607 = vmatpush.msra.mxu0 %v1586
    %1608 = vmatpush.msra.mxu0 %v1585
    %1609 = vmatmul.f32.gmra.mxu0 %v1591
    %v1610 = vpop.f32.mrf.mxu0
    %v1611 = vadd.f32 0.0, %v1610
    %1612 = vdwg.mxu0
    %1613 = vst.msk [vmem:[#allocation11] sm:$0xff] %vm223, %v1611
    // Predicated region
    $region78: #{context_encoder_forward.1} parent=1 // pred_check
      _
    $region79: #{context_encoder_forward.1} parent=1 // pred_check_branch
      %1615 = sbr.rel (0) target = $region81
    $region80: #{context_encoder_forward.1} parent=1 // pred_region
      %1617 = vsyncadd [#allocation4], 0
      %s1619 = sshll.u32 [#allocation11], 4
      %s1620 = int_to_ptr.vmem [resolvable:$true] %s1619
      %s1621 = sshll.u32 %s14, 4
      %s1622 = int_to_ptr.hbm [resolvable:$true] %s1621
      %1624 = dma.vmem_to_hbm [thread:$0]  %s1620, 128, %s1622, [#allocation4]
    $region81: #{context_encoder_forward.1} parent=1 // pred_fallthru
      _
    // Predicated region
    $region82: #{context_encoder_forward.1} parent=1 // pred_check
      _
    $region83: #{context_encoder_forward.1} parent=1 // pred_check_branch
      %1626 = sbr.rel (0) target = $region85
    $region84: #{context_encoder_forward.1} parent=1 // pred_region
      %1628 = dma.done [#allocation4], 128
    $region85: #{context_encoder_forward.1} parent=1 // pred_fallthru
      _
    %1629 = vsyncpa [#allocation3], 1
    %1630 = vsyncpa [#allocation6], 1
    %1631 = vsyncpa [#allocation9], 1
    %1632 = vsyncpa [#allocation4], 1

</llo_original>
